<compile_context>
chip_gen: v7x
topology: tpu7x:2x2x1
jax: 0.10.0
libtpu: 0.0.40
codegen_flags: <defaults>
</compile_context>

<pallas_src>
import functools
import math

import jax
import jax.numpy as jnp
from jax import lax
from jax.experimental import pallas as pl
from jax.experimental.pallas import tpu as pltpu


def _round_up(x: int, m: int) -> int:
    return ((x + m - 1) // m) * m


def _largest_divisor_at_most(n: int, cap: int) -> int:
    for d in range(min(n, cap), 0, -1):
        if n % d == 0:
            return d
    return 1


def _lstm_recurrent_kernel(gx_ref, whh_hbm, out_ref,
                           h_scr, c_scr, whh_scr, dma_sem,
                           *, hidden_pad, time_chunk, matmul_dtype):
    """Recurrent part only.

    gx_ref  : (TT, B_tile, 4*H_pad) f32 — precomputed x @ W_ih^T + bias (time-major).
    whh_hbm : (H_pad, 4*H_pad) in HBM (memory_space=ANY); copied once per batch tile
              into whh_scr (single-buffered VMEM), dtype = matmul_dtype.
    h/c_scr : (B_tile, H_pad) f32 state, persistent across the sequential time axis.
    """
    t_chunk = pl.program_id(1)

    @pl.when(t_chunk == 0)
    def _init():
        h_scr[...] = jnp.zeros_like(h_scr)
        c_scr[...] = jnp.zeros_like(c_scr)
        # Load W_hh^T exactly once per batch tile (single buffer, no pipeliner
        # double-buffering of an invariant weight).
        cp = pltpu.make_async_copy(whh_hbm, whh_scr, dma_sem)
        cp.start()
        cp.wait()

    H = hidden_pad

    def step(i, carry):
        # gates = gates_x[t] + h @ W_hh^T   (f32 accumulation on the MXU)
        gates = gx_ref[i] + jnp.dot(
            h_scr[...].astype(matmul_dtype), whh_scr[...],
            preferred_element_type=jnp.float32)
        # PyTorch gate order (i, f, g, o).  H_pad is a multiple of 128, so every
        # slice below is lane-aligned (whole vregs, no XLU lane shuffles).
        i_g = jax.nn.sigmoid(gates[:, 0 * H:1 * H])
        f_g = jax.nn.sigmoid(gates[:, 1 * H:2 * H])
        g_g = jnp.tanh(gates[:, 2 * H:3 * H])
        o_g = jax.nn.sigmoid(gates[:, 3 * H:4 * H])
        c_new = f_g * c_scr[...] + i_g * g_g          # f32 VPU work
        c_scr[...] = c_new
        h_scr[...] = o_g * jnp.tanh(c_new)            # tanh(c_new) computed once
        return carry

    # Unrolled so the LLO scheduler can pipeline MXU / EUP / VPU across steps.
    lax.fori_loop(0, time_chunk, step, 0, unroll=True)

    # Output block index depends only on the batch-tile axis; HBM writeback happens
    # only when the batch tile changes.  Writing every chunk is a tiny VMEM copy and
    # avoids relying on a "last chunk" branch.
    out_ref[...] = h_scr[...].astype(out_ref.dtype)


@functools.partial(jax.jit, static_argnames=("matmul_dtype", "time_chunk"))
def lstm_last_hidden(x_btd, w_ih, w_hh, b_ih, b_hh, *,
                     matmul_dtype=jnp.bfloat16, time_chunk=16):
    """x_btd: (B, T, D).  w_ih: (4H, D), w_hh: (4H, H), b_*: (4H,).
    Returns (B, H) == PyTorch `out[:, -1, :]` with zero initial state."""
    B, T, D = x_btd.shape
    fourH, H = w_hh.shape
    assert fourH == 4 * H and w_ih.shape == (fourH, D)

    # ---- padded sizes ------------------------------------------------------
    H_pad = _round_up(H, 128)                    # lane-aligned gate slices
    G_pad = 4 * H_pad
    B_tile = min(_round_up(B, 8), 128)           # fill >= 8 f32 sublanes per vreg
    B_pad = _round_up(B, B_tile)

    # Time-chunk selection: prefer an exact divisor of T; if only a poor divisor
    # exists (e.g. prime T), keep a large chunk and pad the time axis at the FRONT
    # with zero gate rows (exactly preserves the zero-initial-state recurrence).
    cap = max(int(time_chunk), 1)
    TT = _largest_divisor_at_most(T, cap)
    if 2 * TT <= min(cap, T):
        TT = min(cap, T)
    T_pad = _round_up(T, TT)
    n_b, n_t = B_pad // B_tile, T_pad // TT

    # ---- hoisted input projection: one big MXU matmul in XLA ----------------
    bias = (b_ih + b_hh).astype(jnp.float32)                          # (4H,)
    gx = jnp.einsum("btd,dg->tbg",
                    x_btd.astype(matmul_dtype),
                    jnp.transpose(w_ih).astype(matmul_dtype),
                    preferred_element_type=jnp.float32) + bias        # (T, B, 4H) f32

    # Pad each gate block H -> H_pad, batch B -> B_pad, and time T -> T_pad (front).
    # All pads are zeros, which keep the padded h/c entries exactly zero, so the
    # result for the real rows/lanes is unchanged.
    gx = gx.reshape(T, B, 4, H)
    gx = jnp.pad(gx, ((T_pad - T, 0), (0, B_pad - B), (0, 0), (0, H_pad - H)))
    gx = gx.reshape(T_pad, B_pad, G_pad)

    whh_t = jnp.transpose(w_hh).astype(matmul_dtype).reshape(H, 4, H)  # (H, 4, H)
    whh_t = jnp.pad(whh_t, ((0, H_pad - H), (0, 0), (0, H_pad - H)))
    whh_t = whh_t.reshape(H_pad, G_pad)                                # (H_pad, 4*H_pad)

    # ---- explicit VMEM budget (fits v7x's 64 MiB physical VMEM) -------------
    gates_block_bytes = TT * B_tile * G_pad * 4
    whh_bytes = H_pad * G_pad * whh_t.dtype.itemsize
    out_block_bytes = B_tile * H_pad * 4
    state_bytes = 2 * B_tile * H_pad * 4
    est = (3 * gates_block_bytes + whh_bytes + 2 * out_block_bytes
           + state_bytes + (2 << 20))
    vmem_limit = int(min(max(est, 16 << 20), 48 << 20))

    kernel = functools.partial(_lstm_recurrent_kernel,
                               hidden_pad=H_pad, time_chunk=TT,
                               matmul_dtype=matmul_dtype)

    out_pad = pl.pallas_call(
        kernel,
        out_shape=jax.ShapeDtypeStruct((B_pad, H_pad), jnp.float32),
        grid_spec=pltpu.PrefetchScalarGridSpec(
            num_scalar_prefetch=0,
            grid=(n_b, n_t),
            in_specs=[
                # precomputed gates chunk, time-major
                pl.BlockSpec((TT, B_tile, G_pad), lambda b, t: (t, b, 0)),
                # W_hh^T stays in HBM; copied into VMEM scratch once per batch tile
                pl.BlockSpec(memory_space=pl.ANY),
            ],
            out_specs=pl.BlockSpec((B_tile, H_pad), lambda b, t: (b, 0)),
            scratch_shapes=[
                pltpu.VMEM((B_tile, H_pad), jnp.float32),   # h state
                pltpu.VMEM((B_tile, H_pad), jnp.float32),   # c state
                pltpu.VMEM((H_pad, G_pad), matmul_dtype),   # W_hh^T (single buffer)
                pltpu.SemaphoreType.DMA,                    # weight-load semaphore
            ],
        ),
        compiler_params=pltpu.CompilerParams(
            dimension_semantics=("parallel", "arbitrary"),
            vmem_limit_bytes=vmem_limit,
        ),
    )(gx, whh_t)

    return out_pad[:B, :H]


def _lstm_reference(x_btd, w_ih, w_hh, b_ih, b_hh):
    """Pure-JAX f32 reference (matches PyTorch nn.LSTM gate order i, f, g, o)."""
    B, T, D = x_btd.shape
    H = w_hh.shape[1]
    h = jnp.zeros((B, H), jnp.float32)
    c = jnp.zeros((B, H), jnp.float32)

    def step(carry, x_t):
        h, c = carry
        gates = x_t @ w_ih.T + h @ w_hh.T + b_ih + b_hh
        i = jax.nn.sigmoid(gates[:, 0 * H:1 * H])
        f = jax.nn.sigmoid(gates[:, 1 * H:2 * H])
        g = jnp.tanh(gates[:, 2 * H:3 * H])
        o = jax.nn.sigmoid(gates[:, 3 * H:4 * H])
        c = f * c + i * g
        h = o * jnp.tanh(c)
        return (h, c), None

    (h, _), _ = lax.scan(step, (h, c), jnp.transpose(x_btd, (1, 0, 2)))
    return h


if __name__ == "__main__":
    B, T, D, H = 2, 8, 16, 32

    key = jax.random.PRNGKey(0)
    k_x, k_wih, k_whh, k_bih, k_bhh = jax.random.split(key, 5)

    # PyTorch nn.LSTM default init: U(-1/sqrt(H), 1/sqrt(H))
    bound = 1.0 / math.sqrt(H)
    x = jax.random.normal(k_x, (B, T, D), jnp.float32)
    w_ih = jax.random.uniform(k_wih, (4 * H, D), jnp.float32, -bound, bound)
    w_hh = jax.random.uniform(k_whh, (4 * H, H), jnp.float32, -bound, bound)
    b_ih = jax.random.uniform(k_bih, (4 * H,), jnp.float32, -bound, bound)
    b_hh = jax.random.uniform(k_bhh, (4 * H,), jnp.float32, -bound, bound)

    ref = _lstm_reference(x, w_ih, w_hh, b_ih, b_hh)

    # f32 matmul path (tight check of semantics; time_chunk=4 -> 2 sequential chunks).
    out_f32 = jax.block_until_ready(
        lstm_last_hidden(x, w_ih, w_hh, b_ih, b_hh,
                         matmul_dtype=jnp.float32, time_chunk=4))
    assert out_f32.shape == (B, H)
    assert jnp.allclose(out_f32, ref, atol=1e-4, rtol=1e-4), "f32 path mismatch vs reference"

    # Non-divisible T exercises the zero-gate front-padding path (T=7, TT=4).
    x7 = x[:, :7, :]
    ref7 = _lstm_reference(x7, w_ih, w_hh, b_ih, b_hh)
    out7 = jax.block_until_ready(
        lstm_last_hidden(x7, w_ih, w_hh, b_ih, b_hh,
                         matmul_dtype=jnp.float32, time_chunk=4))
    assert jnp.allclose(out7, ref7, atol=1e-4, rtol=1e-4), "front-padded T mismatch vs reference"

    # Default bf16-MXU path (looser tolerance vs the f32 reference).
    out_bf16 = jax.block_until_ready(
        lstm_last_hidden(x, w_ih, w_hh, b_ih, b_hh, time_chunk=4))
    assert out_bf16.shape == (B, H)
    assert jnp.allclose(out_bf16, ref, atol=7e-2, rtol=7e-2), "bf16 path mismatch vs reference"

    print("KERNEL_OK")
</pallas_src>

<mosaic_0001>
module attributes {stable_mosaic.version = 11 : i64} {
  func.func @_lstm_recurrent_kernel(%arg0: i32, %arg1: i32, %arg2: memref<4x8x512xf32, #tpu.memory_space<vmem>>, %arg3: memref<128x512xf32, #tpu.memory_space<any>>, %arg4: memref<8x128xf32, #tpu.memory_space<vmem>>, %arg5: memref<8x128xf32, #tpu.memory_space<vmem>>, %arg6: memref<8x128xf32, #tpu.memory_space<vmem>>, %arg7: memref<128x512xf32, #tpu.memory_space<vmem>>, %arg8: memref<!tpu.dma_semaphore, #tpu.memory_space<semaphore_mem>>) attributes {dimension_semantics = [#tpu.dimension_semantics<parallel>, #tpu.dimension_semantics<arbitrary>], iteration_bounds = array<i64: 1, 2>, scalar_prefetch = 0 : i64, scratch_operands = 4 : i64, tpu.core_type = #tpu.core_type<tc>, window_params = [{transform_indices = @transform_0, window_bounds = array<i64: 4, 8, 512>}, {}, {transform_indices = @transform_2, window_bounds = array<i64: 8, 128>}]} {
    %c0_i32 = arith.constant 0 : i32
    %0 = arith.cmpi eq, %arg1, %c0_i32 : i32
    %1 = arith.extui %0 : i1 to i32
    %c0_i32_0 = arith.constant 0 : i32
    %2 = arith.cmpi ne, %1, %c0_i32_0 : i32
    scf.if %2 {
      %cst_68 = arith.constant 0.000000e+00 : f32
      %145 = vector.broadcast %cst_68 : f32 to vector<8x128xf32>
      %c0_69 = arith.constant 0 : index
      %c0_70 = arith.constant 0 : index
      %146 = vector.load %arg5[%c0_69, %c0_70] : memref<8x128xf32, #tpu.memory_space<vmem>>, vector<8x128xf32>
      tpu.vector_store %arg5[%c0_69, %c0_70], %145 {strides = array<i32>} : memref<8x128xf32, #tpu.memory_space<vmem>>, vector<8x128xf32>,
      %cst_71 = arith.constant 0.000000e+00 : f32
      %147 = vector.broadcast %cst_71 : f32 to vector<8x128xf32>
      %c0_72 = arith.constant 0 : index
      %c0_73 = arith.constant 0 : index
      %148 = vector.load %arg6[%c0_72, %c0_73] : memref<8x128xf32, #tpu.memory_space<vmem>>, vector<8x128xf32>
      tpu.vector_store %arg6[%c0_72, %c0_73], %147 {strides = array<i32>} : memref<8x128xf32, #tpu.memory_space<vmem>>, vector<8x128xf32>,
      tpu.enqueue_dma source(%arg3 : memref<128x512xf32, #tpu.memory_space<any>>) target(%arg7 : memref<128x512xf32, #tpu.memory_space<vmem>>) target_semaphore(%arg8 : memref<!tpu.dma_semaphore, #tpu.memory_space<semaphore_mem>>)
      tpu.wait_dma2 semaphore(%arg8 : memref<!tpu.dma_semaphore, #tpu.memory_space<semaphore_mem>>) src(%arg3 : memref<128x512xf32, #tpu.memory_space<any>>) dst(%arg7 : memref<128x512xf32, #tpu.memory_space<vmem>>)
    } else {
    }
    %c0_i32_1 = arith.constant 0 : i32
    %3 = arith.index_cast %c0_i32_1 : i32 to index
    %c0 = arith.constant 0 : index
    %c0_2 = arith.constant 0 : index
    %4 = vector.load %arg2[%3, %c0, %c0_2] : memref<4x8x512xf32, #tpu.memory_space<vmem>>, vector<1x8x512xf32>
    %5 = vector.shape_cast %4 : vector<1x8x512xf32> to vector<8x512xf32>
    %c0_3 = arith.constant 0 : index
    %c0_4 = arith.constant 0 : index
    %6 = vector.load %arg5[%c0_3, %c0_4] : memref<8x128xf32, #tpu.memory_space<vmem>>, vector<8x128xf32>
    %c0_5 = arith.constant 0 : index
    %c0_6 = arith.constant 0 : index
    %7 = vector.load %arg7[%c0_5, %c0_6] : memref<128x512xf32, #tpu.memory_space<vmem>>, vector<128x512xf32>
    %cst = arith.constant dense<0.000000e+00> : vector<8x512xf32>
    %8 = tpu.matmul %6, %7, %cst {dimension_numbers = #tpu.dot_dimension_numbers<[1], [0], [0], [1], [0, 0, 1, 1], [], []>} : vector<8x128xf32>, vector<128x512xf32>, vector<8x512xf32> -> vector<8x512xf32>
    %9 = arith.addf %5, %8 : vector<8x512xf32>
    %10 = vector.extract_strided_slice %9 {offsets = [0, 0], sizes = [8, 128], strides = [1, 1]} : vector<8x512xf32> to vector<8x128xf32>
    %11 = arith.negf %10 : vector<8x128xf32>
    %12 = math.exp %11 : vector<8x128xf32>
    %cst_7 = arith.constant 1.000000e+00 : f32
    %13 = vector.broadcast %cst_7 : f32 to vector<8x128xf32>
    %14 = arith.addf %13, %12 : vector<8x128xf32>
    %15 = arith.divf %13, %14 : vector<8x128xf32>
    %16 = vector.extract_strided_slice %9 {offsets = [0, 128], sizes = [8, 128], strides = [1, 1]} : vector<8x512xf32> to vector<8x128xf32>
    %17 = arith.negf %16 : vector<8x128xf32>
    %18 = math.exp %17 : vector<8x128xf32>
    %cst_8 = arith.constant 1.000000e+00 : f32
    %19 = vector.broadcast %cst_8 : f32 to vector<8x128xf32>
    %20 = arith.addf %19, %18 : vector<8x128xf32>
    %21 = arith.divf %19, %20 : vector<8x128xf32>
    %22 = vector.extract_strided_slice %9 {offsets = [0, 256], sizes = [8, 128], strides = [1, 1]} : vector<8x512xf32> to vector<8x128xf32>
    %23 = math.tanh %22 : vector<8x128xf32>
    %24 = vector.extract_strided_slice %9 {offsets = [0, 384], sizes = [8, 128], strides = [1, 1]} : vector<8x512xf32> to vector<8x128xf32>
    %25 = arith.negf %24 : vector<8x128xf32>
    %26 = math.exp %25 : vector<8x128xf32>
    %cst_9 = arith.constant 1.000000e+00 : f32
    %27 = vector.broadcast %cst_9 : f32 to vector<8x128xf32>
    %28 = arith.addf %27, %26 : vector<8x128xf32>
    %29 = arith.divf %27, %28 : vector<8x128xf32>
    %c0_10 = arith.constant 0 : index
    %c0_11 = arith.constant 0 : index
    %30 = vector.load %arg6[%c0_10, %c0_11] : memref<8x128xf32, #tpu.memory_space<vmem>>, vector<8x128xf32>
    %31 = arith.mulf %21, %30 : vector<8x128xf32>
    %32 = arith.mulf %15, %23 : vector<8x128xf32>
    %33 = arith.addf %31, %32 : vector<8x128xf32>
    %c0_12 = arith.constant 0 : index
    %c0_13 = arith.constant 0 : index
    %34 = vector.load %arg6[%c0_12, %c0_13] : memref<8x128xf32, #tpu.memory_space<vmem>>, vector<8x128xf32>
    tpu.vector_store %arg6[%c0_12, %c0_13], %33 {strides = array<i32>} : memref<8x128xf32, #tpu.memory_space<vmem>>, vector<8x128xf32>,
    %35 = math.tanh %33 : vector<8x128xf32>
    %36 = arith.mulf %29, %35 : vector<8x128xf32>
    %c0_14 = arith.constant 0 : index
    %c0_15 = arith.constant 0 : index
    %37 = vector.load %arg5[%c0_14, %c0_15] : memref<8x128xf32, #tpu.memory_space<vmem>>, vector<8x128xf32>
    tpu.vector_store %arg5[%c0_14, %c0_15], %36 {strides = array<i32>} : memref<8x128xf32, #tpu.memory_space<vmem>>, vector<8x128xf32>,
    %c1_i32 = arith.constant 1 : i32
    %38 = arith.index_cast %c1_i32 : i32 to index
    %c0_16 = arith.constant 0 : index
    %c0_17 = arith.constant 0 : index
    %39 = vector.load %arg2[%38, %c0_16, %c0_17] : memref<4x8x512xf32, #tpu.memory_space<vmem>>, vector<1x8x512xf32>
    %40 = vector.shape_cast %39 : vector<1x8x512xf32> to vector<8x512xf32>
    %c0_18 = arith.constant 0 : index
    %c0_19 = arith.constant 0 : index
    %41 = vector.load %arg5[%c0_18, %c0_19] : memref<8x128xf32, #tpu.memory_space<vmem>>, vector<8x128xf32>
    %c0_20 = arith.constant 0 : index
    %c0_21 = arith.constant 0 : index
    %42 = vector.load %arg7[%c0_20, %c0_21] : memref<128x512xf32, #tpu.memory_space<vmem>>, vector<128x512xf32>
    %cst_22 = arith.constant dense<0.000000e+00> : vector<8x512xf32>
    %43 = tpu.matmul %41, %42, %cst_22 {dimension_numbers = #tpu.dot_dimension_numbers<[1], [0], [0], [1], [0, 0, 1, 1], [], []>} : vector<8x128xf32>, vector<128x512xf32>, vector<8x512xf32> -> vector<8x512xf32>
    %44 = arith.addf %40, %43 : vector<8x512xf32>
    %45 = vector.extract_strided_slice %44 {offsets = [0, 0], sizes = [8, 128], strides = [1, 1]} : vector<8x512xf32> to vector<8x128xf32>
    %46 = arith.negf %45 : vector<8x128xf32>
    %47 = math.exp %46 : vector<8x128xf32>
    %cst_23 = arith.constant 1.000000e+00 : f32
    %48 = vector.broadcast %cst_23 : f32 to vector<8x128xf32>
    %49 = arith.addf %48, %47 : vector<8x128xf32>
    %50 = arith.divf %48, %49 : vector<8x128xf32>
    %51 = vector.extract_strided_slice %44 {offsets = [0, 128], sizes = [8, 128], strides = [1, 1]} : vector<8x512xf32> to vector<8x128xf32>
    %52 = arith.negf %51 : vector<8x128xf32>
    %53 = math.exp %52 : vector<8x128xf32>
    %cst_24 = arith.constant 1.000000e+00 : f32
    %54 = vector.broadcast %cst_24 : f32 to vector<8x128xf32>
    %55 = arith.addf %54, %53 : vector<8x128xf32>
    %56 = arith.divf %54, %55 : vector<8x128xf32>
    %57 = vector.extract_strided_slice %44 {offsets = [0, 256], sizes = [8, 128], strides = [1, 1]} : vector<8x512xf32> to vector<8x128xf32>
    %58 = math.tanh %57 : vector<8x128xf32>
    %59 = vector.extract_strided_slice %44 {offsets = [0, 384], sizes = [8, 128], strides = [1, 1]} : vector<8x512xf32> to vector<8x128xf32>
    %60 = arith.negf %59 : vector<8x128xf32>
    %61 = math.exp %60 : vector<8x128xf32>
    %cst_25 = arith.constant 1.000000e+00 : f32
    %62 = vector.broadcast %cst_25 : f32 to vector<8x128xf32>
    %63 = arith.addf %62, %61 : vector<8x128xf32>
    %64 = arith.divf %62, %63 : vector<8x128xf32>
    %c0_26 = arith.constant 0 : index
    %c0_27 = arith.constant 0 : index
    %65 = vector.load %arg6[%c0_26, %c0_27] : memref<8x128xf32, #tpu.memory_space<vmem>>, vector<8x128xf32>
    %66 = arith.mulf %56, %65 : vector<8x128xf32>
    %67 = arith.mulf %50, %58 : vector<8x128xf32>
    %68 = arith.addf %66, %67 : vector<8x128xf32>
    %c0_28 = arith.constant 0 : index
    %c0_29 = arith.constant 0 : index
    %69 = vector.load %arg6[%c0_28, %c0_29] : memref<8x128xf32, #tpu.memory_space<vmem>>, vector<8x128xf32>
    tpu.vector_store %arg6[%c0_28, %c0_29], %68 {strides = array<i32>} : memref<8x128xf32, #tpu.memory_space<vmem>>, vector<8x128xf32>,
    %70 = math.tanh %68 : vector<8x128xf32>
    %71 = arith.mulf %64, %70 : vector<8x128xf32>
    %c0_30 = arith.constant 0 : index
    %c0_31 = arith.constant 0 : index
    %72 = vector.load %arg5[%c0_30, %c0_31] : memref<8x128xf32, #tpu.memory_space<vmem>>, vector<8x128xf32>
    tpu.vector_store %arg5[%c0_30, %c0_31], %71 {strides = array<i32>} : memref<8x128xf32, #tpu.memory_space<vmem>>, vector<8x128xf32>,
    %c2_i32 = arith.constant 2 : i32
    %73 = arith.index_cast %c2_i32 : i32 to index
    %c0_32 = arith.constant 0 : index
    %c0_33 = arith.constant 0 : index
    %74 = vector.load %arg2[%73, %c0_32, %c0_33] : memref<4x8x512xf32, #tpu.memory_space<vmem>>, vector<1x8x512xf32>
    %75 = vector.shape_cast %74 : vector<1x8x512xf32> to vector<8x512xf32>
    %c0_34 = arith.constant 0 : index
    %c0_35 = arith.constant 0 : index
    %76 = vector.load %arg5[%c0_34, %c0_35] : memref<8x128xf32, #tpu.memory_space<vmem>>, vector<8x128xf32>
    %c0_36 = arith.constant 0 : index
    %c0_37 = arith.constant 0 : index
    %77 = vector.load %arg7[%c0_36, %c0_37] : memref<128x512xf32, #tpu.memory_space<vmem>>, vector<128x512xf32>
    %cst_38 = arith.constant dense<0.000000e+00> : vector<8x512xf32>
    %78 = tpu.matmul %76, %77, %cst_38 {dimension_numbers = #tpu.dot_dimension_numbers<[1], [0], [0], [1], [0, 0, 1, 1], [], []>} : vector<8x128xf32>, vector<128x512xf32>, vector<8x512xf32> -> vector<8x512xf32>
    %79 = arith.addf %75, %78 : vector<8x512xf32>
    %80 = vector.extract_strided_slice %79 {offsets = [0, 0], sizes = [8, 128], strides = [1, 1]} : vector<8x512xf32> to vector<8x128xf32>
    %81 = arith.negf %80 : vector<8x128xf32>
    %82 = math.exp %81 : vector<8x128xf32>
    %cst_39 = arith.constant 1.000000e+00 : f32
    %83 = vector.broadcast %cst_39 : f32 to vector<8x128xf32>
    %84 = arith.addf %83, %82 : vector<8x128xf32>
    %85 = arith.divf %83, %84 : vector<8x128xf32>
    %86 = vector.extract_strided_slice %79 {offsets = [0, 128], sizes = [8, 128], strides = [1, 1]} : vector<8x512xf32> to vector<8x128xf32>
    %87 = arith.negf %86 : vector<8x128xf32>
    %88 = math.exp %87 : vector<8x128xf32>
    %cst_40 = arith.constant 1.000000e+00 : f32
    %89 = vector.broadcast %cst_40 : f32 to vector<8x128xf32>
    %90 = arith.addf %89, %88 : vector<8x128xf32>
    %91 = arith.divf %89, %90 : vector<8x128xf32>
    %92 = vector.extract_strided_slice %79 {offsets = [0, 256], sizes = [8, 128], strides = [1, 1]} : vector<8x512xf32> to vector<8x128xf32>
    %93 = math.tanh %92 : vector<8x128xf32>
    %94 = vector.extract_strided_slice %79 {offsets = [0, 384], sizes = [8, 128], strides = [1, 1]} : vector<8x512xf32> to vector<8x128xf32>
    %95 = arith.negf %94 : vector<8x128xf32>
    %96 = math.exp %95 : vector<8x128xf32>
    %cst_41 = arith.constant 1.000000e+00 : f32
    %97 = vector.broadcast %cst_41 : f32 to vector<8x128xf32>
    %98 = arith.addf %97, %96 : vector<8x128xf32>
    %99 = arith.divf %97, %98 : vector<8x128xf32>
    %c0_42 = arith.constant 0 : index
    %c0_43 = arith.constant 0 : index
    %100 = vector.load %arg6[%c0_42, %c0_43] : memref<8x128xf32, #tpu.memory_space<vmem>>, vector<8x128xf32>
    %101 = arith.mulf %91, %100 : vector<8x128xf32>
    %102 = arith.mulf %85, %93 : vector<8x128xf32>
    %103 = arith.addf %101, %102 : vector<8x128xf32>
    %c0_44 = arith.constant 0 : index
    %c0_45 = arith.constant 0 : index
    %104 = vector.load %arg6[%c0_44, %c0_45] : memref<8x128xf32, #tpu.memory_space<vmem>>, vector<8x128xf32>
    tpu.vector_store %arg6[%c0_44, %c0_45], %103 {strides = array<i32>} : memref<8x128xf32, #tpu.memory_space<vmem>>, vector<8x128xf32>,
    %105 = math.tanh %103 : vector<8x128xf32>
    %106 = arith.mulf %99, %105 : vector<8x128xf32>
    %c0_46 = arith.constant 0 : index
    %c0_47 = arith.constant 0 : index
    %107 = vector.load %arg5[%c0_46, %c0_47] : memref<8x128xf32, #tpu.memory_space<vmem>>, vector<8x128xf32>
    tpu.vector_store %arg5[%c0_46, %c0_47], %106 {strides = array<i32>} : memref<8x128xf32, #tpu.memory_space<vmem>>, vector<8x128xf32>,
    %c3_i32 = arith.constant 3 : i32
    %108 = arith.index_cast %c3_i32 : i32 to index
    %c0_48 = arith.constant 0 : index
    %c0_49 = arith.constant 0 : index
    %109 = vector.load %arg2[%108, %c0_48, %c0_49] : memref<4x8x512xf32, #tpu.memory_space<vmem>>, vector<1x8x512xf32>
    %110 = vector.shape_cast %109 : vector<1x8x512xf32> to vector<8x512xf32>
    %c0_50 = arith.constant 0 : index
    %c0_51 = arith.constant 0 : index
    %111 = vector.load %arg5[%c0_50, %c0_51] : memref<8x128xf32, #tpu.memory_space<vmem>>, vector<8x128xf32>
    %c0_52 = arith.constant 0 : index
    %c0_53 = arith.constant 0 : index
    %112 = vector.load %arg7[%c0_52, %c0_53] : memref<128x512xf32, #tpu.memory_space<vmem>>, vector<128x512xf32>
    %cst_54 = arith.constant dense<0.000000e+00> : vector<8x512xf32>
    %113 = tpu.matmul %111, %112, %cst_54 {dimension_numbers = #tpu.dot_dimension_numbers<[1], [0], [0], [1], [0, 0, 1, 1], [], []>} : vector<8x128xf32>, vector<128x512xf32>, vector<8x512xf32> -> vector<8x512xf32>
    %114 = arith.addf %110, %113 : vector<8x512xf32>
    %115 = vector.extract_strided_slice %114 {offsets = [0, 0], sizes = [8, 128], strides = [1, 1]} : vector<8x512xf32> to vector<8x128xf32>
    %116 = arith.negf %115 : vector<8x128xf32>
    %117 = math.exp %116 : vector<8x128xf32>
    %cst_55 = arith.constant 1.000000e+00 : f32
    %118 = vector.broadcast %cst_55 : f32 to vector<8x128xf32>
    %119 = arith.addf %118, %117 : vector<8x128xf32>
    %120 = arith.divf %118, %119 : vector<8x128xf32>
    %121 = vector.extract_strided_slice %114 {offsets = [0, 128], sizes = [8, 128], strides = [1, 1]} : vector<8x512xf32> to vector<8x128xf32>
    %122 = arith.negf %121 : vector<8x128xf32>
    %123 = math.exp %122 : vector<8x128xf32>
    %cst_56 = arith.constant 1.000000e+00 : f32
    %124 = vector.broadcast %cst_56 : f32 to vector<8x128xf32>
    %125 = arith.addf %124, %123 : vector<8x128xf32>
    %126 = arith.divf %124, %125 : vector<8x128xf32>
    %127 = vector.extract_strided_slice %114 {offsets = [0, 256], sizes = [8, 128], strides = [1, 1]} : vector<8x512xf32> to vector<8x128xf32>
    %128 = math.tanh %127 : vector<8x128xf32>
    %129 = vector.extract_strided_slice %114 {offsets = [0, 384], sizes = [8, 128], strides = [1, 1]} : vector<8x512xf32> to vector<8x128xf32>
    %130 = arith.negf %129 : vector<8x128xf32>
    %131 = math.exp %130 : vector<8x128xf32>
    %cst_57 = arith.constant 1.000000e+00 : f32
    %132 = vector.broadcast %cst_57 : f32 to vector<8x128xf32>
    %133 = arith.addf %132, %131 : vector<8x128xf32>
    %134 = arith.divf %132, %133 : vector<8x128xf32>
    %c0_58 = arith.constant 0 : index
    %c0_59 = arith.constant 0 : index
    %135 = vector.load %arg6[%c0_58, %c0_59] : memref<8x128xf32, #tpu.memory_space<vmem>>, vector<8x128xf32>
    %136 = arith.mulf %126, %135 : vector<8x128xf32>
    %137 = arith.mulf %120, %128 : vector<8x128xf32>
    %138 = arith.addf %136, %137 : vector<8x128xf32>
    %c0_60 = arith.constant 0 : index
    %c0_61 = arith.constant 0 : index
    %139 = vector.load %arg6[%c0_60, %c0_61] : memref<8x128xf32, #tpu.memory_space<vmem>>, vector<8x128xf32>
    tpu.vector_store %arg6[%c0_60, %c0_61], %138 {strides = array<i32>} : memref<8x128xf32, #tpu.memory_space<vmem>>, vector<8x128xf32>,
    %140 = math.tanh %138 : vector<8x128xf32>
    %141 = arith.mulf %134, %140 : vector<8x128xf32>
    %c0_62 = arith.constant 0 : index
    %c0_63 = arith.constant 0 : index
    %142 = vector.load %arg5[%c0_62, %c0_63] : memref<8x128xf32, #tpu.memory_space<vmem>>, vector<8x128xf32>
    tpu.vector_store %arg5[%c0_62, %c0_63], %141 {strides = array<i32>} : memref<8x128xf32, #tpu.memory_space<vmem>>, vector<8x128xf32>,
    %c4_i32 = arith.constant 4 : i32
    %c0_64 = arith.constant 0 : index
    %c0_65 = arith.constant 0 : index
    %143 = vector.load %arg5[%c0_64, %c0_65] : memref<8x128xf32, #tpu.memory_space<vmem>>, vector<8x128xf32>
    %c0_66 = arith.constant 0 : index
    %c0_67 = arith.constant 0 : index
    %144 = vector.load %arg4[%c0_66, %c0_67] : memref<8x128xf32, #tpu.memory_space<vmem>>, vector<8x128xf32>
    tpu.vector_store %arg4[%c0_66, %c0_67], %143 {strides = array<i32>} : memref<8x128xf32, #tpu.memory_space<vmem>>, vector<8x128xf32>,
    return
  }
  func.func @transform_0(%arg0: i32, %arg1: i32) -> (i32, i32, i32) {
    %c0_i32 = arith.constant 0 : i32
    %c0_i32_0 = arith.constant 0 : i32
    return %arg1, %arg0, %c0_i32 : i32, i32, i32
  }
  func.func @transform_2(%arg0: i32, %arg1: i32) -> (i32, i32) {
    %c0_i32 = arith.constant 0 : i32
    %c0_i32_0 = arith.constant 0 : i32
    return %arg0, %c0_i32 : i32, i32
  }
}

</mosaic_0001>

<llo_original>
// kernel: lstm_last_hidden.1
$region0: #{lstm_last_hidden.1}
  #allocation0 [shape = 'u32[]', space=smem, size = 0x4, offset = 0x4, fixed_abs, tag = 'smem constant byte address 0x4 - core index']
  #allocation1 [shape = 'u32[144,128]{1,0:T(1,128)}', space=vmem, size = 0x12000, scoped, tag = 'internal scratch']
  #allocation2 [shape = 'f32[8,128]{1,0:T(8,128)}', space=vmem, size = 0x1000, scoped, tag = 'scratch operand']
  #allocation3 [shape = 'f32[8,128]{1,0:T(8,128)}', space=vmem, size = 0x1000, scoped, tag = 'scratch operand']
  #allocation4 [shape = 'f32[128,512]{1,0:T(8,128)}', space=vmem, size = 0x40000, scoped, tag = 'scratch operand']
  #allocation5 [shape = 's32[1]{0}', space=sflag, size = 0x4, scoped, tag = 'scratch operand']
  #allocation6 [shape = 's32[]', space=sflag, size = 0x4, offset = 0, fixed_abs, tag = 'sflag constant byte address 0x0 - dummy sync flag']
  %s0 = inlined_call_operand.vmem [shape: f32[8,8,512], index: 0, kind: input, shape index: {}]
  %s1 = inlined_call_operand.vmem [shape: f32[128,512], index: 1, kind: input, shape index: {}]
  %s2 = inlined_call_operand.vmem [shape: f32[8,128], index: 2, kind: output, shape index: {}]
  %s3 = sld [smem:[#allocation0]]
  $region75: #{lstm_last_hidden.1} parent=0
    _
  %s5 = ssub.s32 1, %s3
  %s6 = scalar_select 0, %s5, %s3
  loop: start=0, step=1, limit=4
  $region2: #{lstm_last_hidden.1} parent=0 // loop_pre_header
    _
  $region3: #{lstm_last_hidden.1} parent=0 // loop_header
    %s8 = sphi 0, %s12
    %p9 = scmp.ge.s32.totalorder %s8, 4
    %s15 = sphi 0, %s27
    %s16 = sphi 0, %s23
    %s17 = sphi 0, %s15
    %s18 = sphi 0, %s16
    %s19 = sphi 0, %s17
    %s20 = sphi 0, %s18
    %s32 = sphi 0, %s34
    %s35 = sphi 0, %s32
    %s36 = sphi 0, %s35
    %s52 = sphi 0, %s36
    %s58 = sphi 0, %s60
    %s61 = sphi 0, %s58
    %s62 = sphi 0, %s61
    %s78 = sphi 0, %s62
  $region4: #{lstm_last_hidden.1} parent=0 // loop_header_branch
    %11 = sbr.rel (%p9) target = $region8
  $region5: #{lstm_last_hidden.1} parent=0 // loop_body
    %s13 = ssub.s32 %s8, 1
    %s14 = ssub.s32 %s8, 2
    %s21 = sadd.s32 1, %s16
    %p22 = scmp.ge.s32.totalorder %s21, 2
    %s23 = scalar_select %p22, 0, %s21
    %s24 = sadd.s32 1, %s15
    %s25 = scalar_select %p22, %s24, %s15
    %p26 = scmp.ge.s32.totalorder %s25, 1
    %s27 = scalar_select %p26, 0, %s25
    %s28 = ssub.s32 %s16, %s23
    %s29 = ssub.s32 %s15, %s27
    %s30 = sor.u32 %s28, %s29
    %p31 = scmp.eq.s32.totalorder %s30, 0
    %s33 = sadd.s32 %s32, 1
    %s34 = scalar_select %p31, %s32, %s33
    %p37 = pneg %p31
    %p38 = scmp.eq.s32.totalorder %s8, 1
    %p39 = por %p37, %p38
    %p40 = scmp.ne.s32.totalorder %s32, %s35
    %p41 = scmp.eq.s32.totalorder %s8, 0
    %p42 = por %p40, %p41
    %p43 = scmp.ne.s32.totalorder %s32, %s35
    %p44 = scmp.eq.s32.totalorder %s13, 1
    %p45 = por %p43, %p44
    %p46 = scmp.ne.s32.totalorder %s35, %s36
    %p47 = scmp.eq.s32.totalorder %s13, 0
    %p48 = por %p46, %p47
    %p49 = scmp.ne.s32.totalorder %s35, %s36
    %p50 = scmp.eq.s32.totalorder %s14, 1
    %p51 = por %p49, %p50
    %p53 = scmp.ne.s32.totalorder %s36, %s52
    %p54 = scmp.eq.s32.totalorder %s14, 0
    %p55 = por %p53, %p54
    %s56 = ssub.s32 %s15, %s27
    %p57 = scmp.eq.s32.totalorder %s56, 0
    %s59 = sadd.s32 %s58, 1
    %s60 = scalar_select %p57, %s58, %s59
    %p63 = pneg %p57
    %p64 = scmp.eq.s32.totalorder %s8, 1
    %p65 = por %p63, %p64
    %p66 = scmp.ne.s32.totalorder %s58, %s61
    %p67 = scmp.eq.s32.totalorder %s8, 0
    %p68 = por %p66, %p67
    %p69 = scmp.ne.s32.totalorder %s58, %s61
    %p70 = scmp.eq.s32.totalorder %s13, 1
    %p71 = por %p69, %p70
    %p72 = scmp.ne.s32.totalorder %s61, %s62
    %p73 = scmp.eq.s32.totalorder %s13, 0
    %p74 = por %p72, %p73
    %p75 = scmp.ne.s32.totalorder %s61, %s62
    %p76 = scmp.eq.s32.totalorder %s14, 1
    %p77 = por %p75, %p76
    %p79 = scmp.ne.s32.totalorder %s62, %s78
    %p80 = scmp.eq.s32.totalorder %s14, 0
    %p81 = por %p79, %p80
    %p82 = scmp.le.s32.totalorder 1, %s8
    %p83 = scmp.lt.s32.totalorder %s8, 3
    %p84 = pnand %p82, %p83
    %p85 = pneg %p84
    // Predicated region
    $region9: #{lstm_last_hidden.1} parent=5 // pred_check
      _
    $region10: #{lstm_last_hidden.1} parent=5 // pred_check_branch
      %87 = sbr.rel (%p84) target = $region12
    $region11: #{lstm_last_hidden.1} parent=5 // pred_region
      %s88 = ssub.s32 %s8, 1
    $region12: #{lstm_last_hidden.1} parent=5 // pred_fallthru
      _
    %p89 = scmp.lt.s32.totalorder %s8, 2
    // Predicated region
    $region13: #{lstm_last_hidden.1} parent=5 // pred_check
      %p90 = pneg %p89
    $region14: #{lstm_last_hidden.1} parent=5 // pred_check_branch
      %92 = sbr.rel (%p90) target = $region16
    $region15: #{lstm_last_hidden.1} parent=5 // pred_region
      // Predicated region
      $region17: #{lstm_last_hidden.1} parent=15 // pred_check
        %p93 = pneg %p42
      $region18: #{lstm_last_hidden.1} parent=15 // pred_check_branch
        %95 = sbr.rel (%p93) target = $region20
      $region19: #{lstm_last_hidden.1} parent=15 // pred_region
        %s96 = smul.u32 4, %s16
        %p97 = scmp.lt.s32.totalorder %s96, 7
        %s98 = scalar_select %p97, %s96, 7
        %p99 = scmp.lt.s32.totalorder %s15, 0
        %s100 = scalar_select %p99, %s15, 0
        %s101 = smul.addr %s100, 4
        %s102 = smul.addr %s98, 4
        %s103 = sadd.s32 %s101, %s102
        %s104 = smul.addr %s103, 8
        %s105 = scalar_lea.vmem %s0, %s104
        %s106 = smul.u32 4, %s16
      $region20: #{lstm_last_hidden.1} parent=15 // pred_fallthru
        _
    $region16: #{lstm_last_hidden.1} parent=5 // pred_fallthru
      _
    %p107 = scmp.le.s32.totalorder 1, %s8
    %p108 = scmp.lt.s32.totalorder %s8, 3
    %p109 = pnand %p107, %p108
    %p110 = pneg %p109
    // Predicated region
    $region21: #{lstm_last_hidden.1} parent=5 // pred_check
      _
    $region22: #{lstm_last_hidden.1} parent=5 // pred_check_branch
      %112 = sbr.rel (%p109) target = $region24
    $region23: #{lstm_last_hidden.1} parent=5 // pred_region
      %s113 = ssub.s32 %s8, 1
      %s114 = smul.u32 4, %s18
      %p115 = scmp.lt.s32.totalorder %s114, 7
      %s116 = scalar_select %p115, %s114, 7
      %p117 = scmp.lt.s32.totalorder %s17, 0
      %s118 = scalar_select %p117, %s17, 0
      %s119 = smul.addr %s118, 4
      %s120 = smul.addr %s116, 4
      %s121 = sadd.s32 %s119, %s120
      %s122 = smul.addr %s121, 8
      %s123 = scalar_lea.vmem %s0, %s122
      %p124 = pneg %p48
      %p125 = pneg %p45
      %p126 = pneg %p74
      %p127 = pneg %p71
      %p128 = scmp.lt.s32.totalorder %s17, 0
      %s129 = scalar_select %p128, %s17, 0
      %s130 = smul.addr %s129, 8
      %s131 = scalar_lea.vmem %s2, %s130
      %s132 = smul.u32 4, %s18
      %p133 = scmp.lt.s32.totalorder %s132, 7
      %s134 = scalar_select %p133, %s132, 7
      %p135 = scmp.lt.s32.totalorder %s17, 0
      %s136 = scalar_select %p135, %s17, 0
      %s137 = smul.addr %s136, 4
      %s138 = smul.addr %s134, 4
      %s139 = sadd.s32 %s137, %s138
      %s140 = smul.addr %s139, 8
      %s141 = scalar_lea.vmem %s0, %s140
      %s142 = smul.u32 4, %s18
      %p143 = scmp.lt.s32.totalorder %s17, 0
      %s144 = scalar_select %p143, %s17, 0
      %s145 = smul.addr %s144, 8
      %s146 = scalar_lea.vmem %s2, %s145
      %p147 = scmp.eq.s32.totalorder %s18, 0
      // Predicated region
      $region25: #{lstm_last_hidden.1} parent=23 // pred_check
        %p148 = pneg %p147
      $region26: #{lstm_last_hidden.1} parent=23 // pred_check_branch
        %150 = sbr.rel (%p148) target = $region28
      $region27: #{lstm_last_hidden.1} parent=23 // pred_region
        %151 = vst [vmem:[#allocation2] sm:$0xff] 0.0
        %152 = vst [vmem:[#allocation3] sm:$0xff] 0.0
        %p154 = scmp.lt.u32.totalorder 512, 8
        %p155 = pneg %p154
        // Predicated region
        $region29: #{lstm_last_hidden.1} parent=27 // pred_check
          _
        $region30: #{lstm_last_hidden.1} parent=27 // pred_check_branch
          %157 = sbr.rel (%p154) target = $region32
        $region31: #{lstm_last_hidden.1} parent=27 // pred_region
          %s172 = sand.u32 512, 7
          %p173 = scmp.eq.s32.totalorder %s172, 0
          // Predicated region
          $region44: #{lstm_last_hidden.1} parent=31 // pred_check
            %p174 = pneg %p173
          $region45: #{lstm_last_hidden.1} parent=31 // pred_check_branch
            %176 = sbr.rel (%p174) target = $region47
          $region46: #{lstm_last_hidden.1} parent=31 // pred_region
            loop: start=0, step=1, limit=1
            $region48: #{lstm_last_hidden.1} parent=46 // loop_pre_header
              _
            $region49: #{lstm_last_hidden.1} parent=46 // loop_header
              %s178 = sphi 0, %s182
              %p179 = scmp.ge.s32.totalorder %s178, 1
              %s183 = sphi %s1, %s1
              %s184 = sphi [#allocation4], [#allocation4]
            $region50: #{lstm_last_hidden.1} parent=46 // loop_header_branch
              %181 = sbr.rel (%p179) target = $region54
            $region51: #{lstm_last_hidden.1} parent=46 // loop_body
              %v185 = vld [vmem:[%s183] sm:$0xff]
              %186 = vst [vmem:[%s184] sm:$0xff] %v185
              %v187 = vld [vmem:[%s183 + $0x8] sm:$0xff]
              %188 = vst [vmem:[%s184 + $0x8] sm:$0xff] %v187
              %v189 = vld [vmem:[%s183 + $0x10] sm:$0xff]
              %190 = vst [vmem:[%s184 + $0x10] sm:$0xff] %v189
              %v191 = vld [vmem:[%s183 + $0x18] sm:$0xff]
              %192 = vst [vmem:[%s184 + $0x18] sm:$0xff] %v191
              %v193 = vld [vmem:[%s183 + $0x20] sm:$0xff]
              %194 = vst [vmem:[%s184 + $0x20] sm:$0xff] %v193
              %v195 = vld [vmem:[%s183 + $0x28] sm:$0xff]
              %196 = vst [vmem:[%s184 + $0x28] sm:$0xff] %v195
              %v197 = vld [vmem:[%s183 + $0x30] sm:$0xff]
              %198 = vst [vmem:[%s184 + $0x30] sm:$0xff] %v197
              %v199 = vld [vmem:[%s183 + $0x38] sm:$0xff]
              %200 = vst [vmem:[%s184 + $0x38] sm:$0xff] %v199
              %v201 = vld [vmem:[%s183 + $0x40] sm:$0xff]
              %202 = vst [vmem:[%s184 + $0x40] sm:$0xff] %v201
              %v203 = vld [vmem:[%s183 + $0x48] sm:$0xff]
              %204 = vst [vmem:[%s184 + $0x48] sm:$0xff] %v203
              %v205 = vld [vmem:[%s183 + $0x50] sm:$0xff]
              %206 = vst [vmem:[%s184 + $0x50] sm:$0xff] %v205
              %v207 = vld [vmem:[%s183 + $0x58] sm:$0xff]
              %208 = vst [vmem:[%s184 + $0x58] sm:$0xff] %v207
              %v209 = vld [vmem:[%s183 + $0x60] sm:$0xff]
              %210 = vst [vmem:[%s184 + $0x60] sm:$0xff] %v209
              %v211 = vld [vmem:[%s183 + $0x68] sm:$0xff]
              %212 = vst [vmem:[%s184 + $0x68] sm:$0xff] %v211
              %v213 = vld [vmem:[%s183 + $0x70] sm:$0xff]
              %214 = vst [vmem:[%s184 + $0x70] sm:$0xff] %v213
              %v215 = vld [vmem:[%s183 + $0x78] sm:$0xff]
              %216 = vst [vmem:[%s184 + $0x78] sm:$0xff] %v215
              %v217 = vld [vmem:[%s183 + $0x80] sm:$0xff]
              %218 = vst [vmem:[%s184 + $0x80] sm:$0xff] %v217
              %v219 = vld [vmem:[%s183 + $0x88] sm:$0xff]
              %220 = vst [vmem:[%s184 + $0x88] sm:$0xff] %v219
              %v221 = vld [vmem:[%s183 + $0x90] sm:$0xff]
              %222 = vst [vmem:[%s184 + $0x90] sm:$0xff] %v221
              %v223 = vld [vmem:[%s183 + $0x98] sm:$0xff]
              %224 = vst [vmem:[%s184 + $0x98] sm:$0xff] %v223
              %v225 = vld [vmem:[%s183 + $0xa0] sm:$0xff]
              %226 = vst [vmem:[%s184 + $0xa0] sm:$0xff] %v225
              %v227 = vld [vmem:[%s183 + $0xa8] sm:$0xff]
              %228 = vst [vmem:[%s184 + $0xa8] sm:$0xff] %v227
              %v229 = vld [vmem:[%s183 + $0xb0] sm:$0xff]
              %230 = vst [vmem:[%s184 + $0xb0] sm:$0xff] %v229
              %v231 = vld [vmem:[%s183 + $0xb8] sm:$0xff]
              %232 = vst [vmem:[%s184 + $0xb8] sm:$0xff] %v231
              %v233 = vld [vmem:[%s183 + $0xc0] sm:$0xff]
              %234 = vst [vmem:[%s184 + $0xc0] sm:$0xff] %v233
              %v235 = vld [vmem:[%s183 + $0xc8] sm:$0xff]
              %236 = vst [vmem:[%s184 + $0xc8] sm:$0xff] %v235
              %v237 = vld [vmem:[%s183 + $0xd0] sm:$0xff]
              %238 = vst [vmem:[%s184 + $0xd0] sm:$0xff] %v237
              %v239 = vld [vmem:[%s183 + $0xd8] sm:$0xff]
              %240 = vst [vmem:[%s184 + $0xd8] sm:$0xff] %v239
              %v241 = vld [vmem:[%s183 + $0xe0] sm:$0xff]
              %242 = vst [vmem:[%s184 + $0xe0] sm:$0xff] %v241
              %v243 = vld [vmem:[%s183 + $0xe8] sm:$0xff]
              %244 = vst [vmem:[%s184 + $0xe8] sm:$0xff] %v243
              %v245 = vld [vmem:[%s183 + $0xf0] sm:$0xff]
              %246 = vst [vmem:[%s184 + $0xf0] sm:$0xff] %v245
              %v247 = vld [vmem:[%s183 + $0xf8] sm:$0xff]
              %248 = vst [vmem:[%s184 + $0xf8] sm:$0xff] %v247
              %v249 = vld [vmem:[%s183 + $0x100] sm:$0xff]
              %250 = vst [vmem:[%s184 + $0x100] sm:$0xff] %v249
              %v251 = vld [vmem:[%s183 + $0x108] sm:$0xff]
              %252 = vst [vmem:[%s184 + $0x108] sm:$0xff] %v251
              %v253 = vld [vmem:[%s183 + $0x110] sm:$0xff]
              %254 = vst [vmem:[%s184 + $0x110] sm:$0xff] %v253
              %v255 = vld [vmem:[%s183 + $0x118] sm:$0xff]
              %256 = vst [vmem:[%s184 + $0x118] sm:$0xff] %v255
              %v257 = vld [vmem:[%s183 + $0x120] sm:$0xff]
              %258 = vst [vmem:[%s184 + $0x120] sm:$0xff] %v257
              %v259 = vld [vmem:[%s183 + $0x128] sm:$0xff]
              %260 = vst [vmem:[%s184 + $0x128] sm:$0xff] %v259
              %v261 = vld [vmem:[%s183 + $0x130] sm:$0xff]
              %262 = vst [vmem:[%s184 + $0x130] sm:$0xff] %v261
              %v263 = vld [vmem:[%s183 + $0x138] sm:$0xff]
              %264 = vst [vmem:[%s184 + $0x138] sm:$0xff] %v263
              %v265 = vld [vmem:[%s183 + $0x140] sm:$0xff]
              %266 = vst [vmem:[%s184 + $0x140] sm:$0xff] %v265
              %v267 = vld [vmem:[%s183 + $0x148] sm:$0xff]
              %268 = vst [vmem:[%s184 + $0x148] sm:$0xff] %v267
              %v269 = vld [vmem:[%s183 + $0x150] sm:$0xff]
              %270 = vst [vmem:[%s184 + $0x150] sm:$0xff] %v269
              %v271 = vld [vmem:[%s183 + $0x158] sm:$0xff]
              %272 = vst [vmem:[%s184 + $0x158] sm:$0xff] %v271
              %v273 = vld [vmem:[%s183 + $0x160] sm:$0xff]
              %274 = vst [vmem:[%s184 + $0x160] sm:$0xff] %v273
              %v275 = vld [vmem:[%s183 + $0x168] sm:$0xff]
              %276 = vst [vmem:[%s184 + $0x168] sm:$0xff] %v275
              %v277 = vld [vmem:[%s183 + $0x170] sm:$0xff]
              %278 = vst [vmem:[%s184 + $0x170] sm:$0xff] %v277
              %v279 = vld [vmem:[%s183 + $0x178] sm:$0xff]
              %280 = vst [vmem:[%s184 + $0x178] sm:$0xff] %v279
              %v281 = vld [vmem:[%s183 + $0x180] sm:$0xff]
              %282 = vst [vmem:[%s184 + $0x180] sm:$0xff] %v281
              %v283 = vld [vmem:[%s183 + $0x188] sm:$0xff]
              %284 = vst [vmem:[%s184 + $0x188] sm:$0xff] %v283
              %v285 = vld [vmem:[%s183 + $0x190] sm:$0xff]
              %286 = vst [vmem:[%s184 + $0x190] sm:$0xff] %v285
              %v287 = vld [vmem:[%s183 + $0x198] sm:$0xff]
              %288 = vst [vmem:[%s184 + $0x198] sm:$0xff] %v287
              %v289 = vld [vmem:[%s183 + $0x1a0] sm:$0xff]
              %290 = vst [vmem:[%s184 + $0x1a0] sm:$0xff] %v289
              %v291 = vld [vmem:[%s183 + $0x1a8] sm:$0xff]
              %292 = vst [vmem:[%s184 + $0x1a8] sm:$0xff] %v291
              %v293 = vld [vmem:[%s183 + $0x1b0] sm:$0xff]
              %294 = vst [vmem:[%s184 + $0x1b0] sm:$0xff] %v293
              %v295 = vld [vmem:[%s183 + $0x1b8] sm:$0xff]
              %296 = vst [vmem:[%s184 + $0x1b8] sm:$0xff] %v295
              %v297 = vld [vmem:[%s183 + $0x1c0] sm:$0xff]
              %298 = vst [vmem:[%s184 + $0x1c0] sm:$0xff] %v297
              %v299 = vld [vmem:[%s183 + $0x1c8] sm:$0xff]
              %300 = vst [vmem:[%s184 + $0x1c8] sm:$0xff] %v299
              %v301 = vld [vmem:[%s183 + $0x1d0] sm:$0xff]
              %302 = vst [vmem:[%s184 + $0x1d0] sm:$0xff] %v301
              %v303 = vld [vmem:[%s183 + $0x1d8] sm:$0xff]
              %304 = vst [vmem:[%s184 + $0x1d8] sm:$0xff] %v303
              %v305 = vld [vmem:[%s183 + $0x1e0] sm:$0xff]
              %306 = vst [vmem:[%s184 + $0x1e0] sm:$0xff] %v305
              %v307 = vld [vmem:[%s183 + $0x1e8] sm:$0xff]
              %308 = vst [vmem:[%s184 + $0x1e8] sm:$0xff] %v307
              %v309 = vld [vmem:[%s183 + $0x1f0] sm:$0xff]
              %310 = vst [vmem:[%s184 + $0x1f0] sm:$0xff] %v309
              %v311 = vld [vmem:[%s183 + $0x1f8] sm:$0xff]
              %312 = vst [vmem:[%s184 + $0x1f8] sm:$0xff] %v311
            $region52: #{lstm_last_hidden.1} parent=46 // loop_footer
              %s182 = sadd.s32 1, %s178
            $region53: #{lstm_last_hidden.1} parent=46 // loop_footer_branch
              %177 = sbr.rel target = $region49
            $region54: #{lstm_last_hidden.1} parent=46 // loop_exit
              _
          $region47: #{lstm_last_hidden.1} parent=31 // pred_fallthru
            _
          %p313 = pneg %p173
          // Predicated region
          $region55: #{lstm_last_hidden.1} parent=31 // pred_check
            _
          $region56: #{lstm_last_hidden.1} parent=31 // pred_check_branch
            %315 = sbr.rel (%p173) target = $region58
          $region57: #{lstm_last_hidden.1} parent=31 // pred_region
            %s316 = sand.u32 512, 7
          $region58: #{lstm_last_hidden.1} parent=31 // pred_fallthru
            _
        $region32: #{lstm_last_hidden.1} parent=27 // pred_fallthru
          _
        // Predicated region
        $region33: #{lstm_last_hidden.1} parent=27 // pred_check
          %p158 = pneg %p154
        $region34: #{lstm_last_hidden.1} parent=27 // pred_check_branch
          %160 = sbr.rel (%p158) target = $region36
        $region35: #{lstm_last_hidden.1} parent=27 // pred_region
          %s161 = sshllo.u32 0, 512
          loop: start=0, step=1, limit=1
          $region37: #{lstm_last_hidden.1} parent=35 // loop_pre_header
            _
          $region38: #{lstm_last_hidden.1} parent=35 // loop_header
            %s163 = sphi 0, %s167
            %p164 = scmp.ge.s32.totalorder %s163, 1
            %s168 = sphi %s1, %s1
            %s169 = sphi [#allocation4], [#allocation4]
          $region39: #{lstm_last_hidden.1} parent=35 // loop_header_branch
            %166 = sbr.rel (%p164) target = $region43
          $region40: #{lstm_last_hidden.1} parent=35 // loop_body
            %v170 = vld [vmem:[%s168] sm:%s161]
            %171 = vst [vmem:[%s169] sm:%s161] %v170
          $region41: #{lstm_last_hidden.1} parent=35 // loop_footer
            %s167 = sadd.s32 1, %s163
          $region42: #{lstm_last_hidden.1} parent=35 // loop_footer_branch
            %162 = sbr.rel target = $region38
          $region43: #{lstm_last_hidden.1} parent=35 // loop_exit
            _
        $region36: #{lstm_last_hidden.1} parent=27 // pred_fallthru
          _
        // Predicated region
        $region59: #{lstm_last_hidden.1} parent=27 // pred_check
          _
        $region60: #{lstm_last_hidden.1} parent=27 // pred_check_branch
          %319 = sbr.rel (0) target = $region62
        $region61: #{lstm_last_hidden.1} parent=27 // pred_region
          %320 = vsyncadd [#allocation5], 8192
        $region62: #{lstm_last_hidden.1} parent=27 // pred_fallthru
          _
        %s321 = smul.u32 8, 16
        %s322 = smul.u32 %s321, 4
        %s323 = sshll.u32 %s322, 4
        %324 = dma.done [#allocation5], %s323
      $region28: #{lstm_last_hidden.1} parent=23 // pred_fallthru
        _
      %v325 = vld [vmem:[%s141] sm:$0xff]
      %v326 = vld [vmem:[%s141 + $0x8] sm:$0xff]
      %v327 = vld [vmem:[%s141 + $0x10] sm:$0xff]
      %v328 = vld [vmem:[%s141 + $0x18] sm:$0xff]
      %v329 = vld [vmem:[#allocation2] sm:$0xff]
      %v330 = vld [vmem:[#allocation4] sm:$0xff]
      %v331 = vld [vmem:[#allocation4 + $0x8] sm:$0xff]
      %v332 = vld [vmem:[#allocation4 + $0x10] sm:$0xff]
      %v333 = vld [vmem:[#allocation4 + $0x18] sm:$0xff]
      %v334 = vld [vmem:[#allocation4 + $0x20] sm:$0xff]
      %v335 = vld [vmem:[#allocation4 + $0x28] sm:$0xff]
      %v336 = vld [vmem:[#allocation4 + $0x30] sm:$0xff]
      %v337 = vld [vmem:[#allocation4 + $0x38] sm:$0xff]
      %v338 = vld [vmem:[#allocation4 + $0x40] sm:$0xff]
      %v339 = vld [vmem:[#allocation4 + $0x48] sm:$0xff]
      %v340 = vld [vmem:[#allocation4 + $0x50] sm:$0xff]
      %v341 = vld [vmem:[#allocation4 + $0x58] sm:$0xff]
      %v342 = vld [vmem:[#allocation4 + $0x60] sm:$0xff]
      %v343 = vld [vmem:[#allocation4 + $0x68] sm:$0xff]
      %v344 = vld [vmem:[#allocation4 + $0x70] sm:$0xff]
      %v345 = vld [vmem:[#allocation4 + $0x78] sm:$0xff]
      %v346 = vld [vmem:[#allocation4 + $0x80] sm:$0xff]
      %v347 = vld [vmem:[#allocation4 + $0x88] sm:$0xff]
      %v348 = vld [vmem:[#allocation4 + $0x90] sm:$0xff]
      %v349 = vld [vmem:[#allocation4 + $0x98] sm:$0xff]
      %v350 = vld [vmem:[#allocation4 + $0xa0] sm:$0xff]
      %v351 = vld [vmem:[#allocation4 + $0xa8] sm:$0xff]
      %v352 = vld [vmem:[#allocation4 + $0xb0] sm:$0xff]
      %v353 = vld [vmem:[#allocation4 + $0xb8] sm:$0xff]
      %v354 = vld [vmem:[#allocation4 + $0xc0] sm:$0xff]
      %v355 = vld [vmem:[#allocation4 + $0xc8] sm:$0xff]
      %v356 = vld [vmem:[#allocation4 + $0xd0] sm:$0xff]
      %v357 = vld [vmem:[#allocation4 + $0xd8] sm:$0xff]
      %v358 = vld [vmem:[#allocation4 + $0xe0] sm:$0xff]
      %v359 = vld [vmem:[#allocation4 + $0xe8] sm:$0xff]
      %v360 = vld [vmem:[#allocation4 + $0xf0] sm:$0xff]
      %v361 = vld [vmem:[#allocation4 + $0xf8] sm:$0xff]
      %v362 = vld [vmem:[#allocation4 + $0x100] sm:$0xff]
      %v363 = vld [vmem:[#allocation4 + $0x108] sm:$0xff]
      %v364 = vld [vmem:[#allocation4 + $0x110] sm:$0xff]
      %v365 = vld [vmem:[#allocation4 + $0x118] sm:$0xff]
      %v366 = vld [vmem:[#allocation4 + $0x120] sm:$0xff]
      %v367 = vld [vmem:[#allocation4 + $0x128] sm:$0xff]
      %v368 = vld [vmem:[#allocation4 + $0x130] sm:$0xff]
      %v369 = vld [vmem:[#allocation4 + $0x138] sm:$0xff]
      %v370 = vld [vmem:[#allocation4 + $0x140] sm:$0xff]
      %v371 = vld [vmem:[#allocation4 + $0x148] sm:$0xff]
      %v372 = vld [vmem:[#allocation4 + $0x150] sm:$0xff]
      %v373 = vld [vmem:[#allocation4 + $0x158] sm:$0xff]
      %v374 = vld [vmem:[#allocation4 + $0x160] sm:$0xff]
      %v375 = vld [vmem:[#allocation4 + $0x168] sm:$0xff]
      %v376 = vld [vmem:[#allocation4 + $0x170] sm:$0xff]
      %v377 = vld [vmem:[#allocation4 + $0x178] sm:$0xff]
      %v378 = vld [vmem:[#allocation4 + $0x180] sm:$0xff]
      %v379 = vld [vmem:[#allocation4 + $0x188] sm:$0xff]
      %v380 = vld [vmem:[#allocation4 + $0x190] sm:$0xff]
      %v381 = vld [vmem:[#allocation4 + $0x198] sm:$0xff]
      %v382 = vld [vmem:[#allocation4 + $0x1a0] sm:$0xff]
      %v383 = vld [vmem:[#allocation4 + $0x1a8] sm:$0xff]
      %v384 = vld [vmem:[#allocation4 + $0x1b0] sm:$0xff]
      %v385 = vld [vmem:[#allocation4 + $0x1b8] sm:$0xff]
      %v386 = vld [vmem:[#allocation4 + $0x1c0] sm:$0xff]
      %v387 = vld [vmem:[#allocation4 + $0x1c8] sm:$0xff]
      %v388 = vld [vmem:[#allocation4 + $0x1d0] sm:$0xff]
      %v389 = vld [vmem:[#allocation4 + $0x1d8] sm:$0xff]
      %v390 = vld [vmem:[#allocation4 + $0x1e0] sm:$0xff]
      %v391 = vld [vmem:[#allocation4 + $0x1e8] sm:$0xff]
      %v392 = vld [vmem:[#allocation4 + $0x1f0] sm:$0xff]
      %v393 = vld [vmem:[#allocation4 + $0x1f8] sm:$0xff]
      %394 = vmatprep.subr.mxu0 %v331
      %395 = vmatpush1.msra.mxu0 %v330
      %396 = vmatprep.subr.mxu0 %v335
      %397 = vmatpush1.msra.mxu0 %v334
      %398 = vmatprep.subr.mxu0 %v339
      %399 = vmatpush1.msra.mxu0 %v338
      %400 = vmatprep.subr.mxu0 %v343
      %401 = vmatpush1.msra.mxu0 %v342
      %402 = vmatprep.subr.mxu0 %v347
      %403 = vmatpush1.msra.mxu0 %v346
      %404 = vmatprep.subr.mxu0 %v351
      %405 = vmatpush1.msra.mxu0 %v350
      %406 = vmatprep.subr.mxu0 %v355
      %407 = vmatpush1.msra.mxu0 %v354
      %408 = vmatprep.subr.mxu0 %v359
      %409 = vmatpush1.msra.mxu0 %v358
      %410 = vmatprep.subr.mxu0 %v363
      %411 = vmatpush1.msra.mxu0 %v362
      %412 = vmatprep.subr.mxu0 %v367
      %413 = vmatpush1.msra.mxu0 %v366
      %414 = vmatprep.subr.mxu0 %v371
      %415 = vmatpush1.msra.mxu0 %v370
      %416 = vmatprep.subr.mxu0 %v375
      %417 = vmatpush1.msra.mxu0 %v374
      %418 = vmatprep.subr.mxu0 %v379
      %419 = vmatpush1.msra.mxu0 %v378
      %420 = vmatprep.subr.mxu0 %v383
      %421 = vmatpush1.msra.mxu0 %v382
      %422 = vmatprep.subr.mxu0 %v387
      %423 = vmatpush1.msra.mxu0 %v386
      %424 = vmatprep.subr.mxu0 %v391
      %425 = vmatpush1.msra.mxu0 %v390
      %426 = vmatprep.subr.mxu0 0.0
      %427 = vmatpush1.msra.mxu0 0.0
      %428 = vmatprep.subr.mxu0 0.0
      %429 = vmatpush1.msra.mxu0 0.0
      %430 = vmatprep.subr.mxu0 0.0
      %431 = vmatpush1.msra.mxu0 0.0
      %432 = vmatprep.subr.mxu0 0.0
      %433 = vmatpush1.msra.mxu0 0.0
      %434 = vmatprep.subr.mxu0 0.0
      %435 = vmatpush1.msra.mxu0 0.0
      %436 = vmatprep.subr.mxu0 0.0
      %437 = vmatpush1.msra.mxu0 0.0
      %438 = vmatprep.subr.mxu0 0.0
      %439 = vmatpush1.msra.mxu0 0.0
      %440 = vmatprep.subr.mxu0 0.0
      %441 = vmatpush1.msra.mxu0 0.0
      %442 = vmatprep.subr.mxu0 0.0
      %443 = vmatpush1.msra.mxu0 0.0
      %444 = vmatprep.subr.mxu0 0.0
      %445 = vmatpush1.msra.mxu0 0.0
      %446 = vmatprep.subr.mxu0 0.0
      %447 = vmatpush1.msra.mxu0 0.0
      %448 = vmatprep.subr.mxu0 0.0
      %449 = vmatpush1.msra.mxu0 0.0
      %450 = vmatprep.subr.mxu0 0.0
      %451 = vmatpush1.msra.mxu0 0.0
      %452 = vmatprep.subr.mxu0 0.0
      %453 = vmatpush1.msra.mxu0 0.0
      %454 = vmatprep.subr.mxu0 0.0
      %455 = vmatpush1.msra.mxu0 0.0
      %456 = vmatprep.subr.mxu0 0.0
      %457 = vmatpush1.msra.mxu0 0.0
      %458 = vmatprep.mubr.f32.mxu0 0.0
      %459 = vmatmul.mubr.f32.gmra.mrb[0].mxu0 %v329
      %v460 = vpop.f32.mrb[0].mxu0
      %v461 = vadd.f32 0.0, %v460
      %v462 = vpop.f32.mrb[0].mxu0
      %v463 = vadd.f32 0.0, %v462
      %464 = vdwg.mxu0
      %465 = vmatprep.subr.mxu0 %v333
      %466 = vmatpush1.msra.mxu0 %v332
      %467 = vmatprep.subr.mxu0 %v337
      %468 = vmatpush1.msra.mxu0 %v336
      %469 = vmatprep.subr.mxu0 %v341
      %470 = vmatpush1.msra.mxu0 %v340
      %471 = vmatprep.subr.mxu0 %v345
      %472 = vmatpush1.msra.mxu0 %v344
      %473 = vmatprep.subr.mxu0 %v349
      %474 = vmatpush1.msra.mxu0 %v348
      %475 = vmatprep.subr.mxu0 %v353
      %476 = vmatpush1.msra.mxu0 %v352
      %477 = vmatprep.subr.mxu0 %v357
      %478 = vmatpush1.msra.mxu0 %v356
      %479 = vmatprep.subr.mxu0 %v361
      %480 = vmatpush1.msra.mxu0 %v360
      %481 = vmatprep.subr.mxu0 %v365
      %482 = vmatpush1.msra.mxu0 %v364
      %483 = vmatprep.subr.mxu0 %v369
      %484 = vmatpush1.msra.mxu0 %v368
      %485 = vmatprep.subr.mxu0 %v373
      %486 = vmatpush1.msra.mxu0 %v372
      %487 = vmatprep.subr.mxu0 %v377
      %488 = vmatpush1.msra.mxu0 %v376
      %489 = vmatprep.subr.mxu0 %v381
      %490 = vmatpush1.msra.mxu0 %v380
      %491 = vmatprep.subr.mxu0 %v385
      %492 = vmatpush1.msra.mxu0 %v384
      %493 = vmatprep.subr.mxu0 %v389
      %494 = vmatpush1.msra.mxu0 %v388
      %495 = vmatprep.subr.mxu0 %v393
      %496 = vmatpush1.msra.mxu0 %v392
      %497 = vmatprep.subr.mxu0 0.0
      %498 = vmatpush1.msra.mxu0 0.0
      %499 = vmatprep.subr.mxu0 0.0
      %500 = vmatpush1.msra.mxu0 0.0
      %501 = vmatprep.subr.mxu0 0.0
      %502 = vmatpush1.msra.mxu0 0.0
      %503 = vmatprep.subr.mxu0 0.0
      %504 = vmatpush1.msra.mxu0 0.0
      %505 = vmatprep.subr.mxu0 0.0
      %506 = vmatpush1.msra.mxu0 0.0
      %507 = vmatprep.subr.mxu0 0.0
      %508 = vmatpush1.msra.mxu0 0.0
      %509 = vmatprep.subr.mxu0 0.0
      %510 = vmatpush1.msra.mxu0 0.0
      %511 = vmatprep.subr.mxu0 0.0
      %512 = vmatpush1.msra.mxu0 0.0
      %513 = vmatprep.subr.mxu0 0.0
      %514 = vmatpush1.msra.mxu0 0.0
      %515 = vmatprep.subr.mxu0 0.0
      %516 = vmatpush1.msra.mxu0 0.0
      %517 = vmatprep.subr.mxu0 0.0
      %518 = vmatpush1.msra.mxu0 0.0
      %519 = vmatprep.subr.mxu0 0.0
      %520 = vmatpush1.msra.mxu0 0.0
      %521 = vmatprep.subr.mxu0 0.0
      %522 = vmatpush1.msra.mxu0 0.0
      %523 = vmatprep.subr.mxu0 0.0
      %524 = vmatpush1.msra.mxu0 0.0
      %525 = vmatprep.subr.mxu0 0.0
      %526 = vmatpush1.msra.mxu0 0.0
      %527 = vmatprep.subr.mxu0 0.0
      %528 = vmatpush1.msra.mxu0 0.0
      %529 = vmatprep.mubr.f32.mxu0 0.0
      %530 = vmatmul.mubr.f32.gmra.mrb[0].mxu0 %v329
      %v531 = vpop.f32.mrb[0].mxu0
      %v532 = vadd.f32 0.0, %v531
      %v533 = vpop.f32.mrb[0].mxu0
      %v534 = vadd.f32 0.0, %v533
      %535 = vdwg.mxu0
      %v536 = vadd.f32 %v325, %v461
      %v537 = vadd.f32 %v326, %v463
      %v538 = vadd.f32 %v327, %v532
      %v539 = vadd.f32 %v328, %v534
      %v540 = vxor.u32 %v536, 2147483648
      %v541 = vmul.f32 %v540, 1.442695
      %v542 = vpow.pop %v541
      %v543 = vadd.f32 %v542, 1.0
      %v544 = vrcp.pop %v543
      %v545 = vmul.f32 1.0, %v544
      %v546 = vxor.u32 %v537, 2147483648
      %v547 = vmul.f32 %v546, 1.442695
      %v548 = vpow.pop %v547
      %v549 = vadd.f32 %v548, 1.0
      %v550 = vrcp.pop %v549
      %v551 = vmul.f32 1.0, %v550
      %v552 = vtanh.pop %v538
      %v553 = vxor.u32 %v539, 2147483648
      %v554 = vmul.f32 %v553, 1.442695
      %v555 = vpow.pop %v554
      %v556 = vadd.f32 %v555, 1.0
      %v557 = vrcp.pop %v556
      %v558 = vmul.f32 1.0, %v557
      %v559 = vld [vmem:[#allocation3] sm:$0xff]
      %v560 = vmul.f32 %v551, %v559
      %v561 = vmul.f32 %v545, %v552
      %v562 = vadd.f32 %v560, %v561
      %563 = vst [vmem:[#allocation3] sm:$0xff] %v562
      %v564 = vtanh.pop %v562
      %v565 = vmul.f32 %v558, %v564
      %566 = vst [vmem:[#allocation2] sm:$0xff] %v565
      %s567 = scalar_lea.vmem %s141, 32
      %v568 = vld [vmem:[%s567] sm:$0xff]
      %v569 = vld [vmem:[%s567 + $0x8] sm:$0xff]
      %v570 = vld [vmem:[%s567 + $0x10] sm:$0xff]
      %v571 = vld [vmem:[%s567 + $0x18] sm:$0xff]
      %v572 = vld [vmem:[#allocation2] sm:$0xff]
      %v573 = vld [vmem:[#allocation4] sm:$0xff]
      %v574 = vld [vmem:[#allocation4 + $0x8] sm:$0xff]
      %v575 = vld [vmem:[#allocation4 + $0x10] sm:$0xff]
      %v576 = vld [vmem:[#allocation4 + $0x18] sm:$0xff]
      %v577 = vld [vmem:[#allocation4 + $0x20] sm:$0xff]
      %v578 = vld [vmem:[#allocation4 + $0x28] sm:$0xff]
      %v579 = vld [vmem:[#allocation4 + $0x30] sm:$0xff]
      %v580 = vld [vmem:[#allocation4 + $0x38] sm:$0xff]
      %v581 = vld [vmem:[#allocation4 + $0x40] sm:$0xff]
      %v582 = vld [vmem:[#allocation4 + $0x48] sm:$0xff]
      %v583 = vld [vmem:[#allocation4 + $0x50] sm:$0xff]
      %v584 = vld [vmem:[#allocation4 + $0x58] sm:$0xff]
      %v585 = vld [vmem:[#allocation4 + $0x60] sm:$0xff]
      %v586 = vld [vmem:[#allocation4 + $0x68] sm:$0xff]
      %v587 = vld [vmem:[#allocation4 + $0x70] sm:$0xff]
      %v588 = vld [vmem:[#allocation4 + $0x78] sm:$0xff]
      %v589 = vld [vmem:[#allocation4 + $0x80] sm:$0xff]
      %v590 = vld [vmem:[#allocation4 + $0x88] sm:$0xff]
      %v591 = vld [vmem:[#allocation4 + $0x90] sm:$0xff]
      %v592 = vld [vmem:[#allocation4 + $0x98] sm:$0xff]
      %v593 = vld [vmem:[#allocation4 + $0xa0] sm:$0xff]
      %v594 = vld [vmem:[#allocation4 + $0xa8] sm:$0xff]
      %v595 = vld [vmem:[#allocation4 + $0xb0] sm:$0xff]
      %v596 = vld [vmem:[#allocation4 + $0xb8] sm:$0xff]
      %v597 = vld [vmem:[#allocation4 + $0xc0] sm:$0xff]
      %v598 = vld [vmem:[#allocation4 + $0xc8] sm:$0xff]
      %v599 = vld [vmem:[#allocation4 + $0xd0] sm:$0xff]
      %v600 = vld [vmem:[#allocation4 + $0xd8] sm:$0xff]
      %v601 = vld [vmem:[#allocation4 + $0xe0] sm:$0xff]
      %v602 = vld [vmem:[#allocation4 + $0xe8] sm:$0xff]
      %v603 = vld [vmem:[#allocation4 + $0xf0] sm:$0xff]
      %v604 = vld [vmem:[#allocation4 + $0xf8] sm:$0xff]
      %v605 = vld [vmem:[#allocation4 + $0x100] sm:$0xff]
      %v606 = vld [vmem:[#allocation4 + $0x108] sm:$0xff]
      %v607 = vld [vmem:[#allocation4 + $0x110] sm:$0xff]
      %v608 = vld [vmem:[#allocation4 + $0x118] sm:$0xff]
      %v609 = vld [vmem:[#allocation4 + $0x120] sm:$0xff]
      %v610 = vld [vmem:[#allocation4 + $0x128] sm:$0xff]
      %v611 = vld [vmem:[#allocation4 + $0x130] sm:$0xff]
      %v612 = vld [vmem:[#allocation4 + $0x138] sm:$0xff]
      %v613 = vld [vmem:[#allocation4 + $0x140] sm:$0xff]
      %v614 = vld [vmem:[#allocation4 + $0x148] sm:$0xff]
      %v615 = vld [vmem:[#allocation4 + $0x150] sm:$0xff]
      %v616 = vld [vmem:[#allocation4 + $0x158] sm:$0xff]
      %v617 = vld [vmem:[#allocation4 + $0x160] sm:$0xff]
      %v618 = vld [vmem:[#allocation4 + $0x168] sm:$0xff]
      %v619 = vld [vmem:[#allocation4 + $0x170] sm:$0xff]
      %v620 = vld [vmem:[#allocation4 + $0x178] sm:$0xff]
      %v621 = vld [vmem:[#allocation4 + $0x180] sm:$0xff]
      %v622 = vld [vmem:[#allocation4 + $0x188] sm:$0xff]
      %v623 = vld [vmem:[#allocation4 + $0x190] sm:$0xff]
      %v624 = vld [vmem:[#allocation4 + $0x198] sm:$0xff]
      %v625 = vld [vmem:[#allocation4 + $0x1a0] sm:$0xff]
      %v626 = vld [vmem:[#allocation4 + $0x1a8] sm:$0xff]
      %v627 = vld [vmem:[#allocation4 + $0x1b0] sm:$0xff]
      %v628 = vld [vmem:[#allocation4 + $0x1b8] sm:$0xff]
      %v629 = vld [vmem:[#allocation4 + $0x1c0] sm:$0xff]
      %v630 = vld [vmem:[#allocation4 + $0x1c8] sm:$0xff]
      %v631 = vld [vmem:[#allocation4 + $0x1d0] sm:$0xff]
      %v632 = vld [vmem:[#allocation4 + $0x1d8] sm:$0xff]
      %v633 = vld [vmem:[#allocation4 + $0x1e0] sm:$0xff]
      %v634 = vld [vmem:[#allocation4 + $0x1e8] sm:$0xff]
      %v635 = vld [vmem:[#allocation4 + $0x1f0] sm:$0xff]
      %v636 = vld [vmem:[#allocation4 + $0x1f8] sm:$0xff]
      %637 = vmatprep.subr.mxu0 %v574
      %638 = vmatpush1.msra.mxu0 %v573
      %639 = vmatprep.subr.mxu0 %v578
      %640 = vmatpush1.msra.mxu0 %v577
      %641 = vmatprep.subr.mxu0 %v582
      %642 = vmatpush1.msra.mxu0 %v581
      %643 = vmatprep.subr.mxu0 %v586
      %644 = vmatpush1.msra.mxu0 %v585
      %645 = vmatprep.subr.mxu0 %v590
      %646 = vmatpush1.msra.mxu0 %v589
      %647 = vmatprep.subr.mxu0 %v594
      %648 = vmatpush1.msra.mxu0 %v593
      %649 = vmatprep.subr.mxu0 %v598
      %650 = vmatpush1.msra.mxu0 %v597
      %651 = vmatprep.subr.mxu0 %v602
      %652 = vmatpush1.msra.mxu0 %v601
      %653 = vmatprep.subr.mxu0 %v606
      %654 = vmatpush1.msra.mxu0 %v605
      %655 = vmatprep.subr.mxu0 %v610
      %656 = vmatpush1.msra.mxu0 %v609
      %657 = vmatprep.subr.mxu0 %v614
      %658 = vmatpush1.msra.mxu0 %v613
      %659 = vmatprep.subr.mxu0 %v618
      %660 = vmatpush1.msra.mxu0 %v617
      %661 = vmatprep.subr.mxu0 %v622
      %662 = vmatpush1.msra.mxu0 %v621
      %663 = vmatprep.subr.mxu0 %v626
      %664 = vmatpush1.msra.mxu0 %v625
      %665 = vmatprep.subr.mxu0 %v630
      %666 = vmatpush1.msra.mxu0 %v629
      %667 = vmatprep.subr.mxu0 %v634
      %668 = vmatpush1.msra.mxu0 %v633
      %669 = vmatprep.subr.mxu0 0.0
      %670 = vmatpush1.msra.mxu0 0.0
      %671 = vmatprep.subr.mxu0 0.0
      %672 = vmatpush1.msra.mxu0 0.0
      %673 = vmatprep.subr.mxu0 0.0
      %674 = vmatpush1.msra.mxu0 0.0
      %675 = vmatprep.subr.mxu0 0.0
      %676 = vmatpush1.msra.mxu0 0.0
      %677 = vmatprep.subr.mxu0 0.0
      %678 = vmatpush1.msra.mxu0 0.0
      %679 = vmatprep.subr.mxu0 0.0
      %680 = vmatpush1.msra.mxu0 0.0
      %681 = vmatprep.subr.mxu0 0.0
      %682 = vmatpush1.msra.mxu0 0.0
      %683 = vmatprep.subr.mxu0 0.0
      %684 = vmatpush1.msra.mxu0 0.0
      %685 = vmatprep.subr.mxu0 0.0
      %686 = vmatpush1.msra.mxu0 0.0
      %687 = vmatprep.subr.mxu0 0.0
      %688 = vmatpush1.msra.mxu0 0.0
      %689 = vmatprep.subr.mxu0 0.0
      %690 = vmatpush1.msra.mxu0 0.0
      %691 = vmatprep.subr.mxu0 0.0
      %692 = vmatpush1.msra.mxu0 0.0
      %693 = vmatprep.subr.mxu0 0.0
      %694 = vmatpush1.msra.mxu0 0.0
      %695 = vmatprep.subr.mxu0 0.0
      %696 = vmatpush1.msra.mxu0 0.0
      %697 = vmatprep.subr.mxu0 0.0
      %698 = vmatpush1.msra.mxu0 0.0
      %699 = vmatprep.subr.mxu0 0.0
      %700 = vmatpush1.msra.mxu0 0.0
      %701 = vmatprep.mubr.f32.mxu0 0.0
      %702 = vmatmul.mubr.f32.gmra.mrb[0].mxu0 %v572
      %v703 = vpop.f32.mrb[0].mxu0
      %v704 = vadd.f32 0.0, %v703
      %v705 = vpop.f32.mrb[0].mxu0
      %v706 = vadd.f32 0.0, %v705
      %707 = vdwg.mxu0
      %708 = vmatprep.subr.mxu0 %v576
      %709 = vmatpush1.msra.mxu0 %v575
      %710 = vmatprep.subr.mxu0 %v580
      %711 = vmatpush1.msra.mxu0 %v579
      %712 = vmatprep.subr.mxu0 %v584
      %713 = vmatpush1.msra.mxu0 %v583
      %714 = vmatprep.subr.mxu0 %v588
      %715 = vmatpush1.msra.mxu0 %v587
      %716 = vmatprep.subr.mxu0 %v592
      %717 = vmatpush1.msra.mxu0 %v591
      %718 = vmatprep.subr.mxu0 %v596
      %719 = vmatpush1.msra.mxu0 %v595
      %720 = vmatprep.subr.mxu0 %v600
      %721 = vmatpush1.msra.mxu0 %v599
      %722 = vmatprep.subr.mxu0 %v604
      %723 = vmatpush1.msra.mxu0 %v603
      %724 = vmatprep.subr.mxu0 %v608
      %725 = vmatpush1.msra.mxu0 %v607
      %726 = vmatprep.subr.mxu0 %v612
      %727 = vmatpush1.msra.mxu0 %v611
      %728 = vmatprep.subr.mxu0 %v616
      %729 = vmatpush1.msra.mxu0 %v615
      %730 = vmatprep.subr.mxu0 %v620
      %731 = vmatpush1.msra.mxu0 %v619
      %732 = vmatprep.subr.mxu0 %v624
      %733 = vmatpush1.msra.mxu0 %v623
      %734 = vmatprep.subr.mxu0 %v628
      %735 = vmatpush1.msra.mxu0 %v627
      %736 = vmatprep.subr.mxu0 %v632
      %737 = vmatpush1.msra.mxu0 %v631
      %738 = vmatprep.subr.mxu0 %v636
      %739 = vmatpush1.msra.mxu0 %v635
      %740 = vmatprep.subr.mxu0 0.0
      %741 = vmatpush1.msra.mxu0 0.0
      %742 = vmatprep.subr.mxu0 0.0
      %743 = vmatpush1.msra.mxu0 0.0
      %744 = vmatprep.subr.mxu0 0.0
      %745 = vmatpush1.msra.mxu0 0.0
      %746 = vmatprep.subr.mxu0 0.0
      %747 = vmatpush1.msra.mxu0 0.0
      %748 = vmatprep.subr.mxu0 0.0
      %749 = vmatpush1.msra.mxu0 0.0
      %750 = vmatprep.subr.mxu0 0.0
      %751 = vmatpush1.msra.mxu0 0.0
      %752 = vmatprep.subr.mxu0 0.0
      %753 = vmatpush1.msra.mxu0 0.0
      %754 = vmatprep.subr.mxu0 0.0
      %755 = vmatpush1.msra.mxu0 0.0
      %756 = vmatprep.subr.mxu0 0.0
      %757 = vmatpush1.msra.mxu0 0.0
      %758 = vmatprep.subr.mxu0 0.0
      %759 = vmatpush1.msra.mxu0 0.0
      %760 = vmatprep.subr.mxu0 0.0
      %761 = vmatpush1.msra.mxu0 0.0
      %762 = vmatprep.subr.mxu0 0.0
      %763 = vmatpush1.msra.mxu0 0.0
      %764 = vmatprep.subr.mxu0 0.0
      %765 = vmatpush1.msra.mxu0 0.0
      %766 = vmatprep.subr.mxu0 0.0
      %767 = vmatpush1.msra.mxu0 0.0
      %768 = vmatprep.subr.mxu0 0.0
      %769 = vmatpush1.msra.mxu0 0.0
      %770 = vmatprep.subr.mxu0 0.0
      %771 = vmatpush1.msra.mxu0 0.0
      %772 = vmatprep.mubr.f32.mxu0 0.0
      %773 = vmatmul.mubr.f32.gmra.mrb[0].mxu0 %v572
      %v774 = vpop.f32.mrb[0].mxu0
      %v775 = vadd.f32 0.0, %v774
      %v776 = vpop.f32.mrb[0].mxu0
      %v777 = vadd.f32 0.0, %v776
      %778 = vdwg.mxu0
      %v779 = vadd.f32 %v568, %v704
      %v780 = vadd.f32 %v569, %v706
      %v781 = vadd.f32 %v570, %v775
      %v782 = vadd.f32 %v571, %v777
      %v783 = vxor.u32 %v779, 2147483648
      %v784 = vmul.f32 %v783, 1.442695
      %v785 = vpow.pop %v784
      %v786 = vadd.f32 %v785, 1.0
      %v787 = vrcp.pop %v786
      %v788 = vmul.f32 1.0, %v787
      %v789 = vxor.u32 %v780, 2147483648
      %v790 = vmul.f32 %v789, 1.442695
      %v791 = vpow.pop %v790
      %v792 = vadd.f32 %v791, 1.0
      %v793 = vrcp.pop %v792
      %v794 = vmul.f32 1.0, %v793
      %v795 = vtanh.pop %v781
      %v796 = vxor.u32 %v782, 2147483648
      %v797 = vmul.f32 %v796, 1.442695
      %v798 = vpow.pop %v797
      %v799 = vadd.f32 %v798, 1.0
      %v800 = vrcp.pop %v799
      %v801 = vmul.f32 1.0, %v800
      %v802 = vld [vmem:[#allocation3] sm:$0xff]
      %v803 = vmul.f32 %v794, %v802
      %v804 = vmul.f32 %v788, %v795
      %v805 = vadd.f32 %v803, %v804
      %806 = vst [vmem:[#allocation3] sm:$0xff] %v805
      %v807 = vtanh.pop %v805
      %v808 = vmul.f32 %v801, %v807
      %809 = vst [vmem:[#allocation2] sm:$0xff] %v808
      %s810 = scalar_lea.vmem %s141, 64
      %v811 = vld [vmem:[%s810] sm:$0xff]
      %v812 = vld [vmem:[%s810 + $0x8] sm:$0xff]
      %v813 = vld [vmem:[%s810 + $0x10] sm:$0xff]
      %v814 = vld [vmem:[%s810 + $0x18] sm:$0xff]
      %v815 = vld [vmem:[#allocation2] sm:$0xff]
      %v816 = vld [vmem:[#allocation4] sm:$0xff]
      %v817 = vld [vmem:[#allocation4 + $0x8] sm:$0xff]
      %v818 = vld [vmem:[#allocation4 + $0x10] sm:$0xff]
      %v819 = vld [vmem:[#allocation4 + $0x18] sm:$0xff]
      %v820 = vld [vmem:[#allocation4 + $0x20] sm:$0xff]
      %v821 = vld [vmem:[#allocation4 + $0x28] sm:$0xff]
      %v822 = vld [vmem:[#allocation4 + $0x30] sm:$0xff]
      %v823 = vld [vmem:[#allocation4 + $0x38] sm:$0xff]
      %v824 = vld [vmem:[#allocation4 + $0x40] sm:$0xff]
      %v825 = vld [vmem:[#allocation4 + $0x48] sm:$0xff]
      %v826 = vld [vmem:[#allocation4 + $0x50] sm:$0xff]
      %v827 = vld [vmem:[#allocation4 + $0x58] sm:$0xff]
      %v828 = vld [vmem:[#allocation4 + $0x60] sm:$0xff]
      %v829 = vld [vmem:[#allocation4 + $0x68] sm:$0xff]
      %v830 = vld [vmem:[#allocation4 + $0x70] sm:$0xff]
      %v831 = vld [vmem:[#allocation4 + $0x78] sm:$0xff]
      %v832 = vld [vmem:[#allocation4 + $0x80] sm:$0xff]
      %v833 = vld [vmem:[#allocation4 + $0x88] sm:$0xff]
      %v834 = vld [vmem:[#allocation4 + $0x90] sm:$0xff]
      %v835 = vld [vmem:[#allocation4 + $0x98] sm:$0xff]
      %v836 = vld [vmem:[#allocation4 + $0xa0] sm:$0xff]
      %v837 = vld [vmem:[#allocation4 + $0xa8] sm:$0xff]
      %v838 = vld [vmem:[#allocation4 + $0xb0] sm:$0xff]
      %v839 = vld [vmem:[#allocation4 + $0xb8] sm:$0xff]
      %v840 = vld [vmem:[#allocation4 + $0xc0] sm:$0xff]
      %v841 = vld [vmem:[#allocation4 + $0xc8] sm:$0xff]
      %v842 = vld [vmem:[#allocation4 + $0xd0] sm:$0xff]
      %v843 = vld [vmem:[#allocation4 + $0xd8] sm:$0xff]
      %v844 = vld [vmem:[#allocation4 + $0xe0] sm:$0xff]
      %v845 = vld [vmem:[#allocation4 + $0xe8] sm:$0xff]
      %v846 = vld [vmem:[#allocation4 + $0xf0] sm:$0xff]
      %v847 = vld [vmem:[#allocation4 + $0xf8] sm:$0xff]
      %v848 = vld [vmem:[#allocation4 + $0x100] sm:$0xff]
      %v849 = vld [vmem:[#allocation4 + $0x108] sm:$0xff]
      %v850 = vld [vmem:[#allocation4 + $0x110] sm:$0xff]
      %v851 = vld [vmem:[#allocation4 + $0x118] sm:$0xff]
      %v852 = vld [vmem:[#allocation4 + $0x120] sm:$0xff]
      %v853 = vld [vmem:[#allocation4 + $0x128] sm:$0xff]
      %v854 = vld [vmem:[#allocation4 + $0x130] sm:$0xff]
      %v855 = vld [vmem:[#allocation4 + $0x138] sm:$0xff]
      %v856 = vld [vmem:[#allocation4 + $0x140] sm:$0xff]
      %v857 = vld [vmem:[#allocation4 + $0x148] sm:$0xff]
      %v858 = vld [vmem:[#allocation4 + $0x150] sm:$0xff]
      %v859 = vld [vmem:[#allocation4 + $0x158] sm:$0xff]
      %v860 = vld [vmem:[#allocation4 + $0x160] sm:$0xff]
      %v861 = vld [vmem:[#allocation4 + $0x168] sm:$0xff]
      %v862 = vld [vmem:[#allocation4 + $0x170] sm:$0xff]
      %v863 = vld [vmem:[#allocation4 + $0x178] sm:$0xff]
      %v864 = vld [vmem:[#allocation4 + $0x180] sm:$0xff]
      %v865 = vld [vmem:[#allocation4 + $0x188] sm:$0xff]
      %v866 = vld [vmem:[#allocation4 + $0x190] sm:$0xff]
      %v867 = vld [vmem:[#allocation4 + $0x198] sm:$0xff]
      %v868 = vld [vmem:[#allocation4 + $0x1a0] sm:$0xff]
      %v869 = vld [vmem:[#allocation4 + $0x1a8] sm:$0xff]
      %v870 = vld [vmem:[#allocation4 + $0x1b0] sm:$0xff]
      %v871 = vld [vmem:[#allocation4 + $0x1b8] sm:$0xff]
      %v872 = vld [vmem:[#allocation4 + $0x1c0] sm:$0xff]
      %v873 = vld [vmem:[#allocation4 + $0x1c8] sm:$0xff]
      %v874 = vld [vmem:[#allocation4 + $0x1d0] sm:$0xff]
      %v875 = vld [vmem:[#allocation4 + $0x1d8] sm:$0xff]
      %v876 = vld [vmem:[#allocation4 + $0x1e0] sm:$0xff]
      %v877 = vld [vmem:[#allocation4 + $0x1e8] sm:$0xff]
      %v878 = vld [vmem:[#allocation4 + $0x1f0] sm:$0xff]
      %v879 = vld [vmem:[#allocation4 + $0x1f8] sm:$0xff]
      %880 = vmatprep.subr.mxu0 %v817
      %881 = vmatpush1.msra.mxu0 %v816
      %882 = vmatprep.subr.mxu0 %v821
      %883 = vmatpush1.msra.mxu0 %v820
      %884 = vmatprep.subr.mxu0 %v825
      %885 = vmatpush1.msra.mxu0 %v824
      %886 = vmatprep.subr.mxu0 %v829
      %887 = vmatpush1.msra.mxu0 %v828
      %888 = vmatprep.subr.mxu0 %v833
      %889 = vmatpush1.msra.mxu0 %v832
      %890 = vmatprep.subr.mxu0 %v837
      %891 = vmatpush1.msra.mxu0 %v836
      %892 = vmatprep.subr.mxu0 %v841
      %893 = vmatpush1.msra.mxu0 %v840
      %894 = vmatprep.subr.mxu0 %v845
      %895 = vmatpush1.msra.mxu0 %v844
      %896 = vmatprep.subr.mxu0 %v849
      %897 = vmatpush1.msra.mxu0 %v848
      %898 = vmatprep.subr.mxu0 %v853
      %899 = vmatpush1.msra.mxu0 %v852
      %900 = vmatprep.subr.mxu0 %v857
      %901 = vmatpush1.msra.mxu0 %v856
      %902 = vmatprep.subr.mxu0 %v861
      %903 = vmatpush1.msra.mxu0 %v860
      %904 = vmatprep.subr.mxu0 %v865
      %905 = vmatpush1.msra.mxu0 %v864
      %906 = vmatprep.subr.mxu0 %v869
      %907 = vmatpush1.msra.mxu0 %v868
      %908 = vmatprep.subr.mxu0 %v873
      %909 = vmatpush1.msra.mxu0 %v872
      %910 = vmatprep.subr.mxu0 %v877
      %911 = vmatpush1.msra.mxu0 %v876
      %912 = vmatprep.subr.mxu0 0.0
      %913 = vmatpush1.msra.mxu0 0.0
      %914 = vmatprep.subr.mxu0 0.0
      %915 = vmatpush1.msra.mxu0 0.0
      %916 = vmatprep.subr.mxu0 0.0
      %917 = vmatpush1.msra.mxu0 0.0
      %918 = vmatprep.subr.mxu0 0.0
      %919 = vmatpush1.msra.mxu0 0.0
      %920 = vmatprep.subr.mxu0 0.0
      %921 = vmatpush1.msra.mxu0 0.0
      %922 = vmatprep.subr.mxu0 0.0
      %923 = vmatpush1.msra.mxu0 0.0
      %924 = vmatprep.subr.mxu0 0.0
      %925 = vmatpush1.msra.mxu0 0.0
      %926 = vmatprep.subr.mxu0 0.0
      %927 = vmatpush1.msra.mxu0 0.0
      %928 = vmatprep.subr.mxu0 0.0
      %929 = vmatpush1.msra.mxu0 0.0
      %930 = vmatprep.subr.mxu0 0.0
      %931 = vmatpush1.msra.mxu0 0.0
      %932 = vmatprep.subr.mxu0 0.0
      %933 = vmatpush1.msra.mxu0 0.0
      %934 = vmatprep.subr.mxu0 0.0
      %935 = vmatpush1.msra.mxu0 0.0
      %936 = vmatprep.subr.mxu0 0.0
      %937 = vmatpush1.msra.mxu0 0.0
      %938 = vmatprep.subr.mxu0 0.0
      %939 = vmatpush1.msra.mxu0 0.0
      %940 = vmatprep.subr.mxu0 0.0
      %941 = vmatpush1.msra.mxu0 0.0
      %942 = vmatprep.subr.mxu0 0.0
      %943 = vmatpush1.msra.mxu0 0.0
      %944 = vmatprep.mubr.f32.mxu0 0.0
      %945 = vmatmul.mubr.f32.gmra.mrb[0].mxu0 %v815
      %v946 = vpop.f32.mrb[0].mxu0
      %v947 = vadd.f32 0.0, %v946
      %v948 = vpop.f32.mrb[0].mxu0
      %v949 = vadd.f32 0.0, %v948
      %950 = vdwg.mxu0
      %951 = vmatprep.subr.mxu0 %v819
      %952 = vmatpush1.msra.mxu0 %v818
      %953 = vmatprep.subr.mxu0 %v823
      %954 = vmatpush1.msra.mxu0 %v822
      %955 = vmatprep.subr.mxu0 %v827
      %956 = vmatpush1.msra.mxu0 %v826
      %957 = vmatprep.subr.mxu0 %v831
      %958 = vmatpush1.msra.mxu0 %v830
      %959 = vmatprep.subr.mxu0 %v835
      %960 = vmatpush1.msra.mxu0 %v834
      %961 = vmatprep.subr.mxu0 %v839
      %962 = vmatpush1.msra.mxu0 %v838
      %963 = vmatprep.subr.mxu0 %v843
      %964 = vmatpush1.msra.mxu0 %v842
      %965 = vmatprep.subr.mxu0 %v847
      %966 = vmatpush1.msra.mxu0 %v846
      %967 = vmatprep.subr.mxu0 %v851
      %968 = vmatpush1.msra.mxu0 %v850
      %969 = vmatprep.subr.mxu0 %v855
      %970 = vmatpush1.msra.mxu0 %v854
      %971 = vmatprep.subr.mxu0 %v859
      %972 = vmatpush1.msra.mxu0 %v858
      %973 = vmatprep.subr.mxu0 %v863
      %974 = vmatpush1.msra.mxu0 %v862
      %975 = vmatprep.subr.mxu0 %v867
      %976 = vmatpush1.msra.mxu0 %v866
      %977 = vmatprep.subr.mxu0 %v871
      %978 = vmatpush1.msra.mxu0 %v870
      %979 = vmatprep.subr.mxu0 %v875
      %980 = vmatpush1.msra.mxu0 %v874
      %981 = vmatprep.subr.mxu0 %v879
      %982 = vmatpush1.msra.mxu0 %v878
      %983 = vmatprep.subr.mxu0 0.0
      %984 = vmatpush1.msra.mxu0 0.0
      %985 = vmatprep.subr.mxu0 0.0
      %986 = vmatpush1.msra.mxu0 0.0
      %987 = vmatprep.subr.mxu0 0.0
      %988 = vmatpush1.msra.mxu0 0.0
      %989 = vmatprep.subr.mxu0 0.0
      %990 = vmatpush1.msra.mxu0 0.0
      %991 = vmatprep.subr.mxu0 0.0
      %992 = vmatpush1.msra.mxu0 0.0
      %993 = vmatprep.subr.mxu0 0.0
      %994 = vmatpush1.msra.mxu0 0.0
      %995 = vmatprep.subr.mxu0 0.0
      %996 = vmatpush1.msra.mxu0 0.0
      %997 = vmatprep.subr.mxu0 0.0
      %998 = vmatpush1.msra.mxu0 0.0
      %999 = vmatprep.subr.mxu0 0.0
      %1000 = vmatpush1.msra.mxu0 0.0
      %1001 = vmatprep.subr.mxu0 0.0
      %1002 = vmatpush1.msra.mxu0 0.0
      %1003 = vmatprep.subr.mxu0 0.0
      %1004 = vmatpush1.msra.mxu0 0.0
      %1005 = vmatprep.subr.mxu0 0.0
      %1006 = vmatpush1.msra.mxu0 0.0
      %1007 = vmatprep.subr.mxu0 0.0
      %1008 = vmatpush1.msra.mxu0 0.0
      %1009 = vmatprep.subr.mxu0 0.0
      %1010 = vmatpush1.msra.mxu0 0.0
      %1011 = vmatprep.subr.mxu0 0.0
      %1012 = vmatpush1.msra.mxu0 0.0
      %1013 = vmatprep.subr.mxu0 0.0
      %1014 = vmatpush1.msra.mxu0 0.0
      %1015 = vmatprep.mubr.f32.mxu0 0.0
      %1016 = vmatmul.mubr.f32.gmra.mrb[0].mxu0 %v815
      %v1017 = vpop.f32.mrb[0].mxu0
      %v1018 = vadd.f32 0.0, %v1017
      %v1019 = vpop.f32.mrb[0].mxu0
      %v1020 = vadd.f32 0.0, %v1019
      %1021 = vdwg.mxu0
      %v1022 = vadd.f32 %v811, %v947
      %v1023 = vadd.f32 %v812, %v949
      %v1024 = vadd.f32 %v813, %v1018
      %v1025 = vadd.f32 %v814, %v1020
      %v1026 = vxor.u32 %v1022, 2147483648
      %v1027 = vmul.f32 %v1026, 1.442695
      %v1028 = vpow.pop %v1027
      %v1029 = vadd.f32 %v1028, 1.0
      %v1030 = vrcp.pop %v1029
      %v1031 = vmul.f32 1.0, %v1030
      %v1032 = vxor.u32 %v1023, 2147483648
      %v1033 = vmul.f32 %v1032, 1.442695
      %v1034 = vpow.pop %v1033
      %v1035 = vadd.f32 %v1034, 1.0
      %v1036 = vrcp.pop %v1035
      %v1037 = vmul.f32 1.0, %v1036
      %v1038 = vtanh.pop %v1024
      %v1039 = vxor.u32 %v1025, 2147483648
      %v1040 = vmul.f32 %v1039, 1.442695
      %v1041 = vpow.pop %v1040
      %v1042 = vadd.f32 %v1041, 1.0
      %v1043 = vrcp.pop %v1042
      %v1044 = vmul.f32 1.0, %v1043
      %v1045 = vld [vmem:[#allocation3] sm:$0xff]
      %v1046 = vmul.f32 %v1037, %v1045
      %v1047 = vmul.f32 %v1031, %v1038
      %v1048 = vadd.f32 %v1046, %v1047
      %1049 = vst [vmem:[#allocation3] sm:$0xff] %v1048
      %v1050 = vtanh.pop %v1048
      %v1051 = vmul.f32 %v1044, %v1050
      %1052 = vst [vmem:[#allocation2] sm:$0xff] %v1051
      %s1053 = scalar_lea.vmem %s141, 96
      %v1054 = vld [vmem:[%s1053] sm:$0xff]
      %v1055 = vld [vmem:[%s1053 + $0x8] sm:$0xff]
      %v1056 = vld [vmem:[%s1053 + $0x10] sm:$0xff]
      %v1057 = vld [vmem:[%s1053 + $0x18] sm:$0xff]
      %v1058 = vld [vmem:[#allocation2] sm:$0xff]
      %v1059 = vld [vmem:[#allocation4] sm:$0xff]
      %v1060 = vld [vmem:[#allocation4 + $0x8] sm:$0xff]
      %v1061 = vld [vmem:[#allocation4 + $0x10] sm:$0xff]
      %v1062 = vld [vmem:[#allocation4 + $0x18] sm:$0xff]
      %v1063 = vld [vmem:[#allocation4 + $0x20] sm:$0xff]
      %v1064 = vld [vmem:[#allocation4 + $0x28] sm:$0xff]
      %v1065 = vld [vmem:[#allocation4 + $0x30] sm:$0xff]
      %v1066 = vld [vmem:[#allocation4 + $0x38] sm:$0xff]
      %v1067 = vld [vmem:[#allocation4 + $0x40] sm:$0xff]
      %v1068 = vld [vmem:[#allocation4 + $0x48] sm:$0xff]
      %v1069 = vld [vmem:[#allocation4 + $0x50] sm:$0xff]
      %v1070 = vld [vmem:[#allocation4 + $0x58] sm:$0xff]
      %v1071 = vld [vmem:[#allocation4 + $0x60] sm:$0xff]
      %v1072 = vld [vmem:[#allocation4 + $0x68] sm:$0xff]
      %v1073 = vld [vmem:[#allocation4 + $0x70] sm:$0xff]
      %v1074 = vld [vmem:[#allocation4 + $0x78] sm:$0xff]
      %v1075 = vld [vmem:[#allocation4 + $0x80] sm:$0xff]
      %v1076 = vld [vmem:[#allocation4 + $0x88] sm:$0xff]
      %v1077 = vld [vmem:[#allocation4 + $0x90] sm:$0xff]
      %v1078 = vld [vmem:[#allocation4 + $0x98] sm:$0xff]
      %v1079 = vld [vmem:[#allocation4 + $0xa0] sm:$0xff]
      %v1080 = vld [vmem:[#allocation4 + $0xa8] sm:$0xff]
      %v1081 = vld [vmem:[#allocation4 + $0xb0] sm:$0xff]
      %v1082 = vld [vmem:[#allocation4 + $0xb8] sm:$0xff]
      %v1083 = vld [vmem:[#allocation4 + $0xc0] sm:$0xff]
      %v1084 = vld [vmem:[#allocation4 + $0xc8] sm:$0xff]
      %v1085 = vld [vmem:[#allocation4 + $0xd0] sm:$0xff]
      %v1086 = vld [vmem:[#allocation4 + $0xd8] sm:$0xff]
      %v1087 = vld [vmem:[#allocation4 + $0xe0] sm:$0xff]
      %v1088 = vld [vmem:[#allocation4 + $0xe8] sm:$0xff]
      %v1089 = vld [vmem:[#allocation4 + $0xf0] sm:$0xff]
      %v1090 = vld [vmem:[#allocation4 + $0xf8] sm:$0xff]
      %v1091 = vld [vmem:[#allocation4 + $0x100] sm:$0xff]
      %v1092 = vld [vmem:[#allocation4 + $0x108] sm:$0xff]
      %v1093 = vld [vmem:[#allocation4 + $0x110] sm:$0xff]
      %v1094 = vld [vmem:[#allocation4 + $0x118] sm:$0xff]
      %v1095 = vld [vmem:[#allocation4 + $0x120] sm:$0xff]
      %v1096 = vld [vmem:[#allocation4 + $0x128] sm:$0xff]
      %v1097 = vld [vmem:[#allocation4 + $0x130] sm:$0xff]
      %v1098 = vld [vmem:[#allocation4 + $0x138] sm:$0xff]
      %v1099 = vld [vmem:[#allocation4 + $0x140] sm:$0xff]
      %v1100 = vld [vmem:[#allocation4 + $0x148] sm:$0xff]
      %v1101 = vld [vmem:[#allocation4 + $0x150] sm:$0xff]
      %v1102 = vld [vmem:[#allocation4 + $0x158] sm:$0xff]
      %v1103 = vld [vmem:[#allocation4 + $0x160] sm:$0xff]
      %v1104 = vld [vmem:[#allocation4 + $0x168] sm:$0xff]
      %v1105 = vld [vmem:[#allocation4 + $0x170] sm:$0xff]
      %v1106 = vld [vmem:[#allocation4 + $0x178] sm:$0xff]
      %v1107 = vld [vmem:[#allocation4 + $0x180] sm:$0xff]
      %v1108 = vld [vmem:[#allocation4 + $0x188] sm:$0xff]
      %v1109 = vld [vmem:[#allocation4 + $0x190] sm:$0xff]
      %v1110 = vld [vmem:[#allocation4 + $0x198] sm:$0xff]
      %v1111 = vld [vmem:[#allocation4 + $0x1a0] sm:$0xff]
      %v1112 = vld [vmem:[#allocation4 + $0x1a8] sm:$0xff]
      %v1113 = vld [vmem:[#allocation4 + $0x1b0] sm:$0xff]
      %v1114 = vld [vmem:[#allocation4 + $0x1b8] sm:$0xff]
      %v1115 = vld [vmem:[#allocation4 + $0x1c0] sm:$0xff]
      %v1116 = vld [vmem:[#allocation4 + $0x1c8] sm:$0xff]
      %v1117 = vld [vmem:[#allocation4 + $0x1d0] sm:$0xff]
      %v1118 = vld [vmem:[#allocation4 + $0x1d8] sm:$0xff]
      %v1119 = vld [vmem:[#allocation4 + $0x1e0] sm:$0xff]
      %v1120 = vld [vmem:[#allocation4 + $0x1e8] sm:$0xff]
      %v1121 = vld [vmem:[#allocation4 + $0x1f0] sm:$0xff]
      %v1122 = vld [vmem:[#allocation4 + $0x1f8] sm:$0xff]
      %1123 = vmatprep.subr.mxu0 %v1060
      %1124 = vmatpush1.msra.mxu0 %v1059
      %1125 = vmatprep.subr.mxu0 %v1064
      %1126 = vmatpush1.msra.mxu0 %v1063
      %1127 = vmatprep.subr.mxu0 %v1068
      %1128 = vmatpush1.msra.mxu0 %v1067
      %1129 = vmatprep.subr.mxu0 %v1072
      %1130 = vmatpush1.msra.mxu0 %v1071
      %1131 = vmatprep.subr.mxu0 %v1076
      %1132 = vmatpush1.msra.mxu0 %v1075
      %1133 = vmatprep.subr.mxu0 %v1080
      %1134 = vmatpush1.msra.mxu0 %v1079
      %1135 = vmatprep.subr.mxu0 %v1084
      %1136 = vmatpush1.msra.mxu0 %v1083
      %1137 = vmatprep.subr.mxu0 %v1088
      %1138 = vmatpush1.msra.mxu0 %v1087
      %1139 = vmatprep.subr.mxu0 %v1092
      %1140 = vmatpush1.msra.mxu0 %v1091
      %1141 = vmatprep.subr.mxu0 %v1096
      %1142 = vmatpush1.msra.mxu0 %v1095
      %1143 = vmatprep.subr.mxu0 %v1100
      %1144 = vmatpush1.msra.mxu0 %v1099
      %1145 = vmatprep.subr.mxu0 %v1104
      %1146 = vmatpush1.msra.mxu0 %v1103
      %1147 = vmatprep.subr.mxu0 %v1108
      %1148 = vmatpush1.msra.mxu0 %v1107
      %1149 = vmatprep.subr.mxu0 %v1112
      %1150 = vmatpush1.msra.mxu0 %v1111
      %1151 = vmatprep.subr.mxu0 %v1116
      %1152 = vmatpush1.msra.mxu0 %v1115
      %1153 = vmatprep.subr.mxu0 %v1120
      %1154 = vmatpush1.msra.mxu0 %v1119
      %1155 = vmatprep.subr.mxu0 0.0
      %1156 = vmatpush1.msra.mxu0 0.0
      %1157 = vmatprep.subr.mxu0 0.0
      %1158 = vmatpush1.msra.mxu0 0.0
      %1159 = vmatprep.subr.mxu0 0.0
      %1160 = vmatpush1.msra.mxu0 0.0
      %1161 = vmatprep.subr.mxu0 0.0
      %1162 = vmatpush1.msra.mxu0 0.0
      %1163 = vmatprep.subr.mxu0 0.0
      %1164 = vmatpush1.msra.mxu0 0.0
      %1165 = vmatprep.subr.mxu0 0.0
      %1166 = vmatpush1.msra.mxu0 0.0
      %1167 = vmatprep.subr.mxu0 0.0
      %1168 = vmatpush1.msra.mxu0 0.0
      %1169 = vmatprep.subr.mxu0 0.0
      %1170 = vmatpush1.msra.mxu0 0.0
      %1171 = vmatprep.subr.mxu0 0.0
      %1172 = vmatpush1.msra.mxu0 0.0
      %1173 = vmatprep.subr.mxu0 0.0
      %1174 = vmatpush1.msra.mxu0 0.0
      %1175 = vmatprep.subr.mxu0 0.0
      %1176 = vmatpush1.msra.mxu0 0.0
      %1177 = vmatprep.subr.mxu0 0.0
      %1178 = vmatpush1.msra.mxu0 0.0
      %1179 = vmatprep.subr.mxu0 0.0
      %1180 = vmatpush1.msra.mxu0 0.0
      %1181 = vmatprep.subr.mxu0 0.0
      %1182 = vmatpush1.msra.mxu0 0.0
      %1183 = vmatprep.subr.mxu0 0.0
      %1184 = vmatpush1.msra.mxu0 0.0
      %1185 = vmatprep.subr.mxu0 0.0
      %1186 = vmatpush1.msra.mxu0 0.0
      %1187 = vmatprep.mubr.f32.mxu0 0.0
      %1188 = vmatmul.mubr.f32.gmra.mrb[0].mxu0 %v1058
      %v1189 = vpop.f32.mrb[0].mxu0
      %v1190 = vadd.f32 0.0, %v1189
      %v1191 = vpop.f32.mrb[0].mxu0
      %v1192 = vadd.f32 0.0, %v1191
      %1193 = vdwg.mxu0
      %1194 = vmatprep.subr.mxu0 %v1062
      %1195 = vmatpush1.msra.mxu0 %v1061
      %1196 = vmatprep.subr.mxu0 %v1066
      %1197 = vmatpush1.msra.mxu0 %v1065
      %1198 = vmatprep.subr.mxu0 %v1070
      %1199 = vmatpush1.msra.mxu0 %v1069
      %1200 = vmatprep.subr.mxu0 %v1074
      %1201 = vmatpush1.msra.mxu0 %v1073
      %1202 = vmatprep.subr.mxu0 %v1078
      %1203 = vmatpush1.msra.mxu0 %v1077
      %1204 = vmatprep.subr.mxu0 %v1082
      %1205 = vmatpush1.msra.mxu0 %v1081
      %1206 = vmatprep.subr.mxu0 %v1086
      %1207 = vmatpush1.msra.mxu0 %v1085
      %1208 = vmatprep.subr.mxu0 %v1090
      %1209 = vmatpush1.msra.mxu0 %v1089
      %1210 = vmatprep.subr.mxu0 %v1094
      %1211 = vmatpush1.msra.mxu0 %v1093
      %1212 = vmatprep.subr.mxu0 %v1098
      %1213 = vmatpush1.msra.mxu0 %v1097
      %1214 = vmatprep.subr.mxu0 %v1102
      %1215 = vmatpush1.msra.mxu0 %v1101
      %1216 = vmatprep.subr.mxu0 %v1106
      %1217 = vmatpush1.msra.mxu0 %v1105
      %1218 = vmatprep.subr.mxu0 %v1110
      %1219 = vmatpush1.msra.mxu0 %v1109
      %1220 = vmatprep.subr.mxu0 %v1114
      %1221 = vmatpush1.msra.mxu0 %v1113
      %1222 = vmatprep.subr.mxu0 %v1118
      %1223 = vmatpush1.msra.mxu0 %v1117
      %1224 = vmatprep.subr.mxu0 %v1122
      %1225 = vmatpush1.msra.mxu0 %v1121
      %1226 = vmatprep.subr.mxu0 0.0
      %1227 = vmatpush1.msra.mxu0 0.0
      %1228 = vmatprep.subr.mxu0 0.0
      %1229 = vmatpush1.msra.mxu0 0.0
      %1230 = vmatprep.subr.mxu0 0.0
      %1231 = vmatpush1.msra.mxu0 0.0
      %1232 = vmatprep.subr.mxu0 0.0
      %1233 = vmatpush1.msra.mxu0 0.0
      %1234 = vmatprep.subr.mxu0 0.0
      %1235 = vmatpush1.msra.mxu0 0.0
      %1236 = vmatprep.subr.mxu0 0.0
      %1237 = vmatpush1.msra.mxu0 0.0
      %1238 = vmatprep.subr.mxu0 0.0
      %1239 = vmatpush1.msra.mxu0 0.0
      %1240 = vmatprep.subr.mxu0 0.0
      %1241 = vmatpush1.msra.mxu0 0.0
      %1242 = vmatprep.subr.mxu0 0.0
      %1243 = vmatpush1.msra.mxu0 0.0
      %1244 = vmatprep.subr.mxu0 0.0
      %1245 = vmatpush1.msra.mxu0 0.0
      %1246 = vmatprep.subr.mxu0 0.0
      %1247 = vmatpush1.msra.mxu0 0.0
      %1248 = vmatprep.subr.mxu0 0.0
      %1249 = vmatpush1.msra.mxu0 0.0
      %1250 = vmatprep.subr.mxu0 0.0
      %1251 = vmatpush1.msra.mxu0 0.0
      %1252 = vmatprep.subr.mxu0 0.0
      %1253 = vmatpush1.msra.mxu0 0.0
      %1254 = vmatprep.subr.mxu0 0.0
      %1255 = vmatpush1.msra.mxu0 0.0
      %1256 = vmatprep.subr.mxu0 0.0
      %1257 = vmatpush1.msra.mxu0 0.0
      %1258 = vmatprep.mubr.f32.mxu0 0.0
      %1259 = vmatmul.mubr.f32.gmra.mrb[0].mxu0 %v1058
      %v1260 = vpop.f32.mrb[0].mxu0
      %v1261 = vadd.f32 0.0, %v1260
      %v1262 = vpop.f32.mrb[0].mxu0
      %v1263 = vadd.f32 0.0, %v1262
      %1264 = vdwg.mxu0
      %v1265 = vadd.f32 %v1054, %v1190
      %v1266 = vadd.f32 %v1055, %v1192
      %v1267 = vadd.f32 %v1056, %v1261
      %v1268 = vadd.f32 %v1057, %v1263
      %v1269 = vxor.u32 %v1265, 2147483648
      %v1270 = vmul.f32 %v1269, 1.442695
      %v1271 = vpow.pop %v1270
      %v1272 = vadd.f32 %v1271, 1.0
      %v1273 = vrcp.pop %v1272
      %v1274 = vmul.f32 1.0, %v1273
      %v1275 = vxor.u32 %v1266, 2147483648
      %v1276 = vmul.f32 %v1275, 1.442695
      %v1277 = vpow.pop %v1276
      %v1278 = vadd.f32 %v1277, 1.0
      %v1279 = vrcp.pop %v1278
      %v1280 = vmul.f32 1.0, %v1279
      %v1281 = vtanh.pop %v1267
      %v1282 = vxor.u32 %v1268, 2147483648
      %v1283 = vmul.f32 %v1282, 1.442695
      %v1284 = vpow.pop %v1283
      %v1285 = vadd.f32 %v1284, 1.0
      %v1286 = vrcp.pop %v1285
      %v1287 = vmul.f32 1.0, %v1286
      %v1288 = vld [vmem:[#allocation3] sm:$0xff]
      %v1289 = vmul.f32 %v1280, %v1288
      %v1290 = vmul.f32 %v1274, %v1281
      %v1291 = vadd.f32 %v1289, %v1290
      %1292 = vst [vmem:[#allocation3] sm:$0xff] %v1291
      %v1293 = vtanh.pop %v1291
      %v1294 = vmul.f32 %v1287, %v1293
      %1295 = vst [vmem:[#allocation2] sm:$0xff] %v1294
      %v1296 = vld [vmem:[#allocation2] sm:$0xff]
      %1297 = vst [vmem:[%s146] sm:$0xff] %v1296
      %p1298 = scmp.lt.s32.totalorder %s17, 0
      %s1299 = scalar_select %p1298, %s17, 0
      %s1300 = smul.addr %s1299, 8
      %s1301 = scalar_lea.vmem %s2, %s1300
      // Predicated region
      $region63: #{lstm_last_hidden.1} parent=23 // pred_check
        %p1302 = pneg %p71
      $region64: #{lstm_last_hidden.1} parent=23 // pred_check_branch
        %1304 = sbr.rel (%p1302) target = $region66
      $region65: #{lstm_last_hidden.1} parent=23 // pred_region
        _
      $region66: #{lstm_last_hidden.1} parent=23 // pred_fallthru
        _
      // Predicated region
      $region67: #{lstm_last_hidden.1} parent=23 // pred_check
        %p1305 = pneg %p71
      $region68: #{lstm_last_hidden.1} parent=23 // pred_check_branch
        %1307 = sbr.rel (%p1305) target = $region70
      $region69: #{lstm_last_hidden.1} parent=23 // pred_region
        %p1308 = scmp.lt.s32.totalorder %s17, 0
        %s1309 = scalar_select %p1308, %s17, 0
        %s1310 = smul.addr %s1309, 8
        %s1311 = scalar_lea.vmem %s2, %s1310
      $region70: #{lstm_last_hidden.1} parent=23 // pred_fallthru
        _
    $region24: #{lstm_last_hidden.1} parent=5 // pred_fallthru
      _
    %p1312 = scmp.le.s32.totalorder 2, %s8
    // Predicated region
    $region71: #{lstm_last_hidden.1} parent=5 // pred_check
      %p1313 = pneg %p1312
    $region72: #{lstm_last_hidden.1} parent=5 // pred_check_branch
      %1315 = sbr.rel (%p1313) target = $region74
    $region73: #{lstm_last_hidden.1} parent=5 // pred_region
      %s1316 = ssub.s32 %s8, 2
    $region74: #{lstm_last_hidden.1} parent=5 // pred_fallthru
      _
  $region6: #{lstm_last_hidden.1} parent=0 // loop_footer
    %s12 = sadd.s32 1, %s8
  $region7: #{lstm_last_hidden.1} parent=0 // loop_footer_branch
    %7 = sbr.rel target = $region3
  $region8: #{lstm_last_hidden.1} parent=0 // loop_exit
    _
  %1317 = vsyncmov [#allocation5]
  %s1318 = vpop.sfrf %1317
  %p1319 = scmp.eq.s32.totalorder %s1318, 0
  %p1320 = pneg %p1319
  %1322 = shalt.err (%p1320)

</llo_original>
